<compile_context>
chip_gen: v5e
topology: v5e:2x2
jax: 0.10.0
libtpu: 0.0.40
codegen_flags: <defaults>
</compile_context>

<pallas_src>
import functools

import jax
import jax.numpy as jnp
from jax import lax
from jax.experimental import pallas as pl
from jax.experimental.pallas import tpu as pltpu


def _lstm_step(gates_x, h, c, whh_bf16, H):
    """One LSTM cell step.  gates_x = x @ W_ih + bias (precomputed, any dtype).
    PyTorch gate order i, f, g, o.  h/c carried in f32; matmul operands bf16."""
    gates = gates_x.astype(jnp.float32) + jnp.dot(
        h.astype(jnp.bfloat16), whh_bf16, preferred_element_type=jnp.float32)
    i = jax.nn.sigmoid(gates[:, 0:H])
    f = jax.nn.sigmoid(gates[:, H:2 * H])
    g = jnp.tanh(gates[:, 2 * H:3 * H])
    o = jax.nn.sigmoid(gates[:, 3 * H:4 * H])
    c_new = f * c + i * g
    h_new = o * jnp.tanh(c_new)
    return h_new, c_new


def segmentor_kernel(hs_ref, golds_ref,
                     wih_bi_ref, whh_f_ref, whh_b_ref, b_bi_ref,
                     sub_whh_ref, sub_b_ref, word_b_ref, cls_b_ref,
                     sub_wih_hbm, word_wihx_hbm, word_whh_hbm, cls_w_hbm,
                     out_ref,
                     fwd_scr, bwd_scr,
                     sub_wih_buf, word_wihx_buf, word_whh_buf, cls_w_buf,
                     dma_sems,
                     *, S, H, Bp, NCLS):
    f32 = jnp.float32
    bf16 = jnp.bfloat16

    # ---- (0) Start just-in-time weight streams (overlap with the serial
    #          bi-LSTM recurrence); wait right before first use. ----
    cp_sub_wih = pltpu.make_async_copy(sub_wih_hbm, sub_wih_buf, dma_sems.at[0])
    cp_word_wihx = pltpu.make_async_copy(word_wihx_hbm, word_wihx_buf, dma_sems.at[1])
    cp_word_whh = pltpu.make_async_copy(word_whh_hbm, word_whh_buf, dma_sems.at[2])
    cp_cls_w = pltpu.make_async_copy(cls_w_hbm, cls_w_buf, dma_sems.at[3])
    cp_sub_wih.start()
    cp_word_wihx.start()
    cp_word_whh.start()
    cp_cls_w.start()

    whh_f = whh_f_ref[...]                                            # bf16 (H, 4H)
    whh_b = whh_b_ref[...]                                            # bf16 (H, 4H)
    zhc = jnp.zeros((Bp, H), f32)

    # ---- (1)+(2) bi-LSTM: single merged bulk input projection (one MXU matmul
    #          over concat(wih_f, wih_b)) then fused fwd/bwd recurrences.  The
    #          (S*Bp, 8H) gate slab is scoped — it is dead after this phase. ----
    def bilstm_phase(gx_scr):
        gx = jnp.dot(hs_ref[...], wih_bi_ref[...],
                     preferred_element_type=f32) + b_bi_ref[...]
        gx_scr[...] = gx.astype(bf16)

        def bilstm_body(t, carry):
            hf, cf, hb, cb = carry
            rf = pl.multiple_of(t * Bp, Bp)
            hf, cf = _lstm_step(gx_scr[pl.ds(rf, Bp), 0:4 * H], hf, cf, whh_f, H)
            fwd_scr[pl.ds(rf, Bp), :] = hf.astype(bf16)
            rb = pl.multiple_of((S - 1 - t) * Bp, Bp)
            hb, cb = _lstm_step(gx_scr[pl.ds(rb, Bp), 4 * H:8 * H], hb, cb, whh_b, H)
            bwd_scr[pl.ds(rb, Bp), :] = hb.astype(bf16)
            return hf, cf, hb, cb

        lax.fori_loop(0, S, bilstm_body, (zhc, zhc, zhc, zhc))

    pl.run_scoped(bilstm_phase, pltpu.VMEM((S * Bp, 8 * H), bf16))

    # ---- (3)+(4)+(5) subword-cell bulk in-projection, sequential decode,
    #          hoisted classifier.  subgx/word_repre scratch is scoped and
    #          shares the VMEM offset of the (now dead) bi-LSTM gate slab. ----
    def decode_phase(subgx_scr, wrep_scr):
        # subword-cell input projection (depends only on fwd/bwd outputs)
        cp_sub_wih.wait()
        sub_wih = sub_wih_buf[...]                                    # bf16 (2H, 4H)
        subgx_scr[...] = (
            jnp.dot(fwd_scr[...], sub_wih[0:H, :], preferred_element_type=f32)
            + jnp.dot(bwd_scr[...], sub_wih[H:2 * H, :], preferred_element_type=f32)
            + sub_b_ref[...]).astype(bf16)

        cp_word_wihx.wait()
        cp_word_whh.wait()
        sub_whh = sub_whh_ref[...]                                    # bf16 (H, 4H)
        word_wihx = word_wihx_buf[...]                                # bf16 (H, 8H)
        word_whh = word_whh_buf[...]                                  # bf16 (H, 4H)
        word_bias = jnp.broadcast_to(word_b_ref[...], (Bp, 4 * H))    # hoisted, f32

        # idx == 0 rows of word_repre are never written by the loop; zero them so
        # the bulk classifier reads defined data (row 0 of pred is overwritten
        # by the wrapper anyway).
        wrep_scr[0:Bp, :] = jnp.zeros((Bp, H), bf16)

        def decode_body(idx, carry):
            sub_h, sub_c, word_h, word_c, wbot = carry
            rprev = pl.multiple_of((idx - 1) * Bp, Bp)
            rcur = pl.multiple_of(idx * Bp, Bp)

            # --- subword = self.subwStackLSTM(lstm_output[:, idx-1, :]) ---
            sh_new, sc_new = _lstm_step(subgx_scr[pl.ds(rprev, Bp), :],
                                        sub_h, sub_c, sub_whh, H)
            # TODO(synk): SubwordLSTMCell source is not provided; its 2H-dim
            # output is assumed to be [new_top_h, previous_top_h].

            # --- word_repre, _ = self.wordStackLSTM(subword) ---
            # One fused (Bp,H)@(H,8H) dot: first 4H columns are this step's
            # sh_new @ W_top term, second 4H are sh_new @ W_bot — masked by
            # `keep` and carried to the next step (replaces the sub_h dot).
            wproj = jnp.dot(sh_new.astype(bf16), word_wihx,
                            preferred_element_type=f32)               # (Bp, 8H)
            gxw = wproj[:, 0:4 * H] + wbot + word_bias
            wh_new, wc_new = _lstm_step(gxw, word_h, word_c, word_whh, H)
            wrep_scr[pl.ds(rcur, Bp), :] = wh_new.astype(bf16)

            # --- training-path actions from golds[:, idx] ---
            g = golds_ref[pl.ds(rcur, Bp), :]                         # (Bp, 1) int32
            keep = g == 0   # subword_action_map = [1,2,2], word_action_map = [0,1,1]
            # TODO(synk): StackLSTMCell.update_pos source is not provided; the
            # stack pointer is assumed to advance by the action value (top-only
            # carry): subword advance-2 lands on a never-written (zero) slot;
            # word advance-0 keeps the old top, advance-1 takes the new top.
            sub_h = jnp.where(keep, sh_new, 0.0)
            sub_c = jnp.where(keep, sc_new, 0.0)
            wbot = jnp.where(keep, wproj[:, 4 * H:8 * H], 0.0)
            word_h = jnp.where(keep, word_h, wh_new)
            word_c = jnp.where(keep, word_c, wc_new)
            return sub_h, sub_c, word_h, word_c, wbot

        z4 = jnp.zeros((Bp, 4 * H), f32)
        lax.fori_loop(1, S, decode_body, (zhc, zhc, zhc, zhc, z4))

        # --- classifier hoisted out of the loop: lane-dense matmuls over all
        #     timesteps + one bulk (unmasked) store. ---
        cp_cls_w.wait()
        cls_w = cls_w_buf[...]                                        # bf16 (3H, NCLS)
        logits = (jnp.dot(wrep_scr[...], cls_w[0:H, :], preferred_element_type=f32)
                  + jnp.dot(fwd_scr[...], cls_w[H:2 * H, :], preferred_element_type=f32)
                  + jnp.dot(bwd_scr[...], cls_w[2 * H:3 * H, :], preferred_element_type=f32)
                  + cls_b_ref[...])
        out_ref[...] = logits

    pl.run_scoped(decode_phase,
                  pltpu.VMEM((S * Bp, 4 * H), bf16),
                  pltpu.VMEM((S * Bp, H), bf16))


_PARAM_ORDER = ("wih_f", "whh_f", "b_f", "wih_b", "whh_b", "b_b",
                "sub_wih", "sub_whh", "sub_b",
                "word_wih", "word_whh", "word_b",
                "cls_w", "cls_b")


def init_params(key, H):
    """Deterministic synthetic parameters matching the module's shapes (scaled to H)."""
    ks = jax.random.split(key, len(_PARAM_ORDER))

    def u(k, shape, scale=0.2):
        return jax.random.uniform(k, shape, jnp.float32, -1.0, 1.0) * scale

    shapes = {
        # nn.LSTM(H, H, bidirectional=True): per-direction W_ih, W_hh, bias (b_ih+b_hh pre-summed)
        "wih_f": (H, 4 * H), "whh_f": (H, 4 * H), "b_f": (1, 4 * H),
        "wih_b": (H, 4 * H), "whh_b": (H, 4 * H), "b_b": (1, 4 * H),
        # SubwordLSTMCell(2H, H)
        "sub_wih": (2 * H, 4 * H), "sub_whh": (H, 4 * H), "sub_b": (1, 4 * H),
        # StackLSTMCell(2H, H)
        "word_wih": (2 * H, 4 * H), "word_whh": (H, 4 * H), "word_b": (1, 4 * H),
        # cls = nn.Linear(3H, 2)
        "cls_w": (3 * H, 2), "cls_b": (1, 2),
    }
    return {name: u(k, shapes[name]) for name, k in zip(_PARAM_ORDER, ks)}


def _padded_vmem_bytes(shape, itemsize):
    """Approx VMEM footprint of a 2-D array with (sublane, lane) tile padding."""
    r, c = shape
    sub = 16 if itemsize == 2 else 8
    rp = -(-r // sub) * sub
    cp = -(-c // 128) * 128
    return rp * cp * itemsize


def bert_stack_segmentor_forward(hidden_state, golds, params):
    """hidden_state: (B, S, H) f32  (stand-in for BERT output[:, 1:S+1, :])
       golds:        (B, S)  int32 gold actions in {0, 1, 2}
       returns pred: (B, S, 2) f32"""
    B, S, H = hidden_state.shape
    Bp = max(((B + 7) // 8) * 8, 8)    # pad batch to a sublane-tile multiple
    NCLS = 128                         # lane-dense classifier / output width
    bf16 = jnp.bfloat16

    # time-major, batch-padded, flattened to 2D rows (row = s*Bp + b); bf16 activations
    hs = jnp.transpose(hidden_state, (1, 0, 2)).astype(jnp.float32)   # (S, B, H)
    hs = jnp.pad(hs, ((0, 0), (0, Bp - B), (0, 0))).reshape(S * Bp, H).astype(bf16)

    g = jnp.transpose(golds.astype(jnp.int32), (1, 0))                # (S, B)
    g = jnp.pad(g, ((0, 0), (0, Bp - B))).reshape(S * Bp, 1)

    p = {k: params[k].astype(jnp.float32) for k in _PARAM_ORDER}
    # bf16 MXU operands; biases kept f32 (added after the f32-accumulated dots)
    wih_bi = jnp.concatenate([p["wih_f"], p["wih_b"]], axis=1).astype(bf16)   # (H, 8H)
    b_bi = jnp.concatenate([p["b_f"], p["b_b"]], axis=1)                      # (1, 8H)
    whh_f = p["whh_f"].astype(bf16)
    whh_b = p["whh_b"].astype(bf16)
    sub_wih = p["sub_wih"].astype(bf16)                                        # (2H, 4H)
    sub_whh = p["sub_whh"].astype(bf16)
    sub_b = p["sub_b"]
    # pre-split + re-concat word_wih so the decode loop never slices a weight:
    word_wihx = jnp.concatenate([p["word_wih"][:H, :], p["word_wih"][H:, :]],
                                axis=1).astype(bf16)                           # (H, 8H)
    word_whh = p["word_whh"].astype(bf16)
    word_b = p["word_b"]
    # zero-pad the 2-logit classifier out to a full 128-lane tile
    cls_w = jnp.pad(p["cls_w"], ((0, 0), (0, NCLS - 2))).astype(bf16)          # (3H, NCLS)
    cls_b = jnp.pad(p["cls_b"], ((0, 0), (0, NCLS - 2)))                       # (1, NCLS)

    # ---- generation-aware VMEM budget (includes weights + golds lane padding) ----
    footprint = [
        ((S * Bp, H), 2),            # hs input
        ((S * Bp, 1), 4),            # golds (lane-padded to 128)
        ((H, 8 * H), 2),             # wih_bi
        ((H, 4 * H), 2), ((H, 4 * H), 2),          # whh_f, whh_b
        ((1, 8 * H), 4), ((1, 4 * H), 4), ((1, 4 * H), 4), ((1, NCLS), 4),  # biases
        ((H, 4 * H), 2),             # sub_whh
        ((S * Bp, NCLS), 4),         # output
        ((S * Bp, H), 2), ((S * Bp, H), 2),        # fwd / bwd scratch
        ((2 * H, 4 * H), 2), ((H, 8 * H), 2), ((H, 4 * H), 2), ((3 * H, NCLS), 2),  # streamed weight bufs
        ((S * Bp, 8 * H), 2),        # run_scoped peak: max(gate slab, subgx+wrep)
        ((S * Bp, 8 * H), 4),        # f32 intermediate of the bulk bi-LSTM projection
    ]
    needed = sum(_padded_vmem_bytes(s, i) for s, i in footprint)
    try:
        vmem_cap = int(getattr(pltpu.get_tpu_info(), "vmem_capacity_bytes", 0)) or (128 << 20)
    except Exception:  # pragma: no cover - fallback if the query is unavailable
        vmem_cap = 128 << 20
    vmem_limit = int(min(max(int(needed * 1.25) + (4 << 20), 32 << 20),
                         int(vmem_cap * 0.9)))

    kernel = functools.partial(segmentor_kernel, S=S, H=H, Bp=Bp, NCLS=NCLS)
    vmem_spec = pl.BlockSpec(memory_space=pltpu.MemorySpace.VMEM)
    any_spec = pl.BlockSpec(memory_space=pl.ANY)      # streamed just-in-time via DMA

    out = pl.pallas_call(
        kernel,
        out_shape=jax.ShapeDtypeStruct((S * Bp, NCLS), jnp.float32),
        in_specs=[vmem_spec] * 10 + [any_spec] * 4,
        out_specs=vmem_spec,
        scratch_shapes=[
            pltpu.VMEM((S * Bp, H), bf16),            # forward LSTM outputs
            pltpu.VMEM((S * Bp, H), bf16),            # backward LSTM outputs
            pltpu.VMEM((2 * H, 4 * H), bf16),         # streamed sub_wih
            pltpu.VMEM((H, 8 * H), bf16),             # streamed word_wih (re-concat)
            pltpu.VMEM((H, 4 * H), bf16),             # streamed word_whh
            pltpu.VMEM((3 * H, NCLS), bf16),          # streamed cls_w (lane-padded)
            pltpu.SemaphoreType.DMA((4,)),            # one sem per streamed weight
        ],
        compiler_params=pltpu.CompilerParams(vmem_limit_bytes=vmem_limit),
    )(hs, g, wih_bi, whh_f, whh_b, b_bi, sub_whh, sub_b, word_b, cls_b,
      sub_wih, word_wihx, word_whh, cls_w)

    out = out.reshape(S, Bp, NCLS)[:, :B, :2]                         # drop padding
    pred = jnp.transpose(out, (1, 0, 2))                              # (B, S, 2)
    # pred[0] = [-1, 1] constant row written here instead of in the kernel epilogue
    pred = pred.at[:, 0, :].set(jnp.array([-1.0, 1.0], jnp.float32))
    return pred


if __name__ == "__main__":
    B, S, H = 2, 8, 32        # small synthetic shapes (real module: H=768)
    key = jax.random.PRNGKey(0)
    k_hs, k_g, k_p = jax.random.split(key, 3)

    # stand-in for BertModel(...)[0][:, 1:S+1, :]
    hidden_state = jax.random.normal(k_hs, (B, S, H), jnp.float32)
    golds = jax.random.randint(k_g, (B, S), 0, 3, jnp.int32)
    params = init_params(k_p, H)

    pred = jax.jit(bert_stack_segmentor_forward)(hidden_state, golds, params)
    jax.block_until_ready(pred)
    assert pred.shape == (B, S, 2) and pred.dtype == jnp.float32
    assert bool(jnp.all(jnp.isfinite(pred)))
    print("KERNEL_OK")
</pallas_src>

<mosaic_0001>
module attributes {stable_mosaic.version = 11 : i64} {
  func.func @segmentor_kernel(%arg0: memref<64x32xbf16, #tpu.memory_space<vmem>>, %arg1: memref<64x1xi32, #tpu.memory_space<vmem>>, %arg2: memref<32x256xbf16, #tpu.memory_space<vmem>>, %arg3: memref<32x128xbf16, #tpu.memory_space<vmem>>, %arg4: memref<32x128xbf16, #tpu.memory_space<vmem>>, %arg5: memref<1x256xf32, #tpu.memory_space<vmem>>, %arg6: memref<32x128xbf16, #tpu.memory_space<vmem>>, %arg7: memref<1x128xf32, #tpu.memory_space<vmem>>, %arg8: memref<1x128xf32, #tpu.memory_space<vmem>>, %arg9: memref<1x128xf32, #tpu.memory_space<vmem>>, %arg10: memref<64x128xbf16, #tpu.memory_space<any>>, %arg11: memref<32x256xbf16, #tpu.memory_space<any>>, %arg12: memref<32x128xbf16, #tpu.memory_space<any>>, %arg13: memref<96x128xbf16, #tpu.memory_space<any>>, %arg14: memref<64x128xf32, #tpu.memory_space<vmem>>, %arg15: memref<64x32xbf16, #tpu.memory_space<vmem>>, %arg16: memref<64x32xbf16, #tpu.memory_space<vmem>>, %arg17: memref<64x128xbf16, #tpu.memory_space<vmem>>, %arg18: memref<32x256xbf16, #tpu.memory_space<vmem>>, %arg19: memref<32x128xbf16, #tpu.memory_space<vmem>>, %arg20: memref<96x128xbf16, #tpu.memory_space<vmem>>, %arg21: memref<4x!tpu.dma_semaphore, #tpu.memory_space<semaphore_mem>>) attributes {dimension_semantics = [], scalar_prefetch = 0 : i64, scratch_operands = 7 : i64, tpu.core_type = #tpu.core_type<tc>} {
    %c0_i32 = arith.constant 0 : i32
    %0 = tpu.memref_slice %arg21[%c0_i32] : memref<4x!tpu.dma_semaphore, #tpu.memory_space<semaphore_mem>> -> memref<1x!tpu.dma_semaphore, #tpu.memory_space<semaphore_mem>>
    %1 = tpu.memref_squeeze %0 : memref<1x!tpu.dma_semaphore, #tpu.memory_space<semaphore_mem>> -> memref<!tpu.dma_semaphore, #tpu.memory_space<semaphore_mem>>
    tpu.enqueue_dma source(%arg10 : memref<64x128xbf16, #tpu.memory_space<any>>) target(%arg17 : memref<64x128xbf16, #tpu.memory_space<vmem>>) target_semaphore(%1 : memref<!tpu.dma_semaphore, #tpu.memory_space<semaphore_mem>>)
    %c1_i32 = arith.constant 1 : i32
    %2 = tpu.memref_slice %arg21[%c1_i32] : memref<4x!tpu.dma_semaphore, #tpu.memory_space<semaphore_mem>> -> memref<1x!tpu.dma_semaphore, #tpu.memory_space<semaphore_mem>>
    %3 = tpu.memref_squeeze %2 : memref<1x!tpu.dma_semaphore, #tpu.memory_space<semaphore_mem>> -> memref<!tpu.dma_semaphore, #tpu.memory_space<semaphore_mem>>
    tpu.enqueue_dma source(%arg11 : memref<32x256xbf16, #tpu.memory_space<any>>) target(%arg18 : memref<32x256xbf16, #tpu.memory_space<vmem>>) target_semaphore(%3 : memref<!tpu.dma_semaphore, #tpu.memory_space<semaphore_mem>>)
    %c2_i32 = arith.constant 2 : i32
    %4 = tpu.memref_slice %arg21[%c2_i32] : memref<4x!tpu.dma_semaphore, #tpu.memory_space<semaphore_mem>> -> memref<1x!tpu.dma_semaphore, #tpu.memory_space<semaphore_mem>>
    %5 = tpu.memref_squeeze %4 : memref<1x!tpu.dma_semaphore, #tpu.memory_space<semaphore_mem>> -> memref<!tpu.dma_semaphore, #tpu.memory_space<semaphore_mem>>
    tpu.enqueue_dma source(%arg12 : memref<32x128xbf16, #tpu.memory_space<any>>) target(%arg19 : memref<32x128xbf16, #tpu.memory_space<vmem>>) target_semaphore(%5 : memref<!tpu.dma_semaphore, #tpu.memory_space<semaphore_mem>>)
    %c3_i32 = arith.constant 3 : i32
    %6 = tpu.memref_slice %arg21[%c3_i32] : memref<4x!tpu.dma_semaphore, #tpu.memory_space<semaphore_mem>> -> memref<1x!tpu.dma_semaphore, #tpu.memory_space<semaphore_mem>>
    %7 = tpu.memref_squeeze %6 : memref<1x!tpu.dma_semaphore, #tpu.memory_space<semaphore_mem>> -> memref<!tpu.dma_semaphore, #tpu.memory_space<semaphore_mem>>
    tpu.enqueue_dma source(%arg13 : memref<96x128xbf16, #tpu.memory_space<any>>) target(%arg20 : memref<96x128xbf16, #tpu.memory_space<vmem>>) target_semaphore(%7 : memref<!tpu.dma_semaphore, #tpu.memory_space<semaphore_mem>>)
    %c0 = arith.constant 0 : index
    %c0_0 = arith.constant 0 : index
    %8 = vector.load %arg3[%c0, %c0_0] : memref<32x128xbf16, #tpu.memory_space<vmem>>, vector<32x128xbf16>
    %c0_1 = arith.constant 0 : index
    %c0_2 = arith.constant 0 : index
    %9 = vector.load %arg4[%c0_1, %c0_2] : memref<32x128xbf16, #tpu.memory_space<vmem>>, vector<32x128xbf16>
    %cst = arith.constant 0.000000e+00 : f32
    %10 = vector.broadcast %cst : f32 to vector<8x32xf32>
    "tpu.region"() ({
      %alloca = memref.alloca() : memref<64x256xbf16, #tpu.memory_space<vmem>>
      %c0_7 = arith.constant 0 : index
      %c0_8 = arith.constant 0 : index
      %11 = vector.load %arg0[%c0_7, %c0_8] : memref<64x32xbf16, #tpu.memory_space<vmem>>, vector<64x32xbf16>
      %c0_9 = arith.constant 0 : index
      %c0_10 = arith.constant 0 : index
      %12 = vector.load %arg2[%c0_9, %c0_10] : memref<32x256xbf16, #tpu.memory_space<vmem>>, vector<32x256xbf16>
      %cst_11 = arith.constant dense<0.000000e+00> : vector<64x256xf32>
      %13 = tpu.matmul %11, %12, %cst_11 {dimension_numbers = #tpu.dot_dimension_numbers<[1], [0], [0], [1], [0, 0, 1, 1], [], []>} : vector<64x32xbf16>, vector<32x256xbf16>, vector<64x256xf32> -> vector<64x256xf32>
      %c0_12 = arith.constant 0 : index
      %c0_13 = arith.constant 0 : index
      %14 = vector.load %arg5[%c0_12, %c0_13] : memref<1x256xf32, #tpu.memory_space<vmem>>, vector<1x256xf32>
      %15 = vector.broadcast %14 : vector<1x256xf32> to vector<64x256xf32>
      %16 = arith.addf %13, %15 : vector<64x256xf32>
      %17 = arith.truncf %16 : vector<64x256xf32> to vector<64x256xbf16>
      %c0_14 = arith.constant 0 : index
      %c0_15 = arith.constant 0 : index
      %18 = vector.load %alloca[%c0_14, %c0_15] : memref<64x256xbf16, #tpu.memory_space<vmem>>, vector<64x256xbf16>
      tpu.vector_store %alloca[%c0_14, %c0_15], %17 {strides = array<i32>} : memref<64x256xbf16, #tpu.memory_space<vmem>>, vector<64x256xbf16>,
      %c0_i32_16 = arith.constant 0 : i32
      %c8_i32 = arith.constant 8 : i32
      %19 = arith.addi %c0_i32_16, %c8_i32 : i32
      %c1_i32_17 = arith.constant 1 : i32
      %20:4 = scf.for %arg22 = %c0_i32_16 to %19 step %c1_i32_17 iter_args(%arg23 = %10, %arg24 = %10, %arg25 = %10, %arg26 = %10) -> (vector<8x32xf32>, vector<8x32xf32>, vector<8x32xf32>, vector<8x32xf32>)  : i32 {
        %c8_i32_19 = arith.constant 8 : i32
        %21 = arith.muli %arg22, %c8_i32_19 : i32
        %22 = tpu.assume_multiple %21, 8 : i32
        %23 = arith.index_cast %22 : i32 to index
        %c0_20 = arith.constant 0 : index
        %24 = vector.load %alloca[%23, %c0_20] : memref<64x256xbf16, #tpu.memory_space<vmem>>, vector<8x128xbf16>
        %25 = arith.extf %24 : vector<8x128xbf16> to vector<8x128xf32>
        %26 = arith.truncf %arg23 : vector<8x32xf32> to vector<8x32xbf16>
        %cst_21 = arith.constant dense<0.000000e+00> : vector<8x128xf32>
        %27 = tpu.matmul %26, %8, %cst_21 {dimension_numbers = #tpu.dot_dimension_numbers<[1], [0], [0], [1], [0, 0, 1, 1], [], []>} : vector<8x32xbf16>, vector<32x128xbf16>, vector<8x128xf32> -> vector<8x128xf32>
        %28 = arith.addf %25, %27 : vector<8x128xf32>
        %29 = vector.extract_strided_slice %28 {offsets = [0, 0], sizes = [8, 32], strides = [1, 1]} : vector<8x128xf32> to vector<8x32xf32>
        %30 = arith.negf %29 : vector<8x32xf32>
        %31 = math.exp %30 : vector<8x32xf32>
        %cst_22 = arith.constant 1.000000e+00 : f32
        %32 = vector.broadcast %cst_22 : f32 to vector<8x32xf32>
        %33 = arith.addf %32, %31 : vector<8x32xf32>
        %34 = arith.divf %32, %33 : vector<8x32xf32>
        %35 = vector.extract_strided_slice %28 {offsets = [0, 32], sizes = [8, 32], strides = [1, 1]} : vector<8x128xf32> to vector<8x32xf32>
        %36 = arith.negf %35 : vector<8x32xf32>
        %37 = math.exp %36 : vector<8x32xf32>
        %cst_23 = arith.constant 1.000000e+00 : f32
        %38 = vector.broadcast %cst_23 : f32 to vector<8x32xf32>
        %39 = arith.addf %38, %37 : vector<8x32xf32>
        %40 = arith.divf %38, %39 : vector<8x32xf32>
        %41 = vector.extract_strided_slice %28 {offsets = [0, 64], sizes = [8, 32], strides = [1, 1]} : vector<8x128xf32> to vector<8x32xf32>
        %42 = math.tanh %41 : vector<8x32xf32>
        %43 = vector.extract_strided_slice %28 {offsets = [0, 96], sizes = [8, 32], strides = [1, 1]} : vector<8x128xf32> to vector<8x32xf32>
        %44 = arith.negf %43 : vector<8x32xf32>
        %45 = math.exp %44 : vector<8x32xf32>
        %cst_24 = arith.constant 1.000000e+00 : f32
        %46 = vector.broadcast %cst_24 : f32 to vector<8x32xf32>
        %47 = arith.addf %46, %45 : vector<8x32xf32>
        %48 = arith.divf %46, %47 : vector<8x32xf32>
        %49 = arith.mulf %40, %arg24 : vector<8x32xf32>
        %50 = arith.mulf %34, %42 : vector<8x32xf32>
        %51 = arith.addf %49, %50 : vector<8x32xf32>
        %52 = math.tanh %51 : vector<8x32xf32>
        %53 = arith.mulf %48, %52 : vector<8x32xf32>
        %54 = arith.truncf %53 : vector<8x32xf32> to vector<8x32xbf16>
        %55 = arith.index_cast %22 : i32 to index
        %c0_25 = arith.constant 0 : index
        %56 = vector.load %arg15[%55, %c0_25] : memref<64x32xbf16, #tpu.memory_space<vmem>>, vector<8x32xbf16>
        tpu.vector_store %arg15[%55, %c0_25], %54 {strides = array<i32>} : memref<64x32xbf16, #tpu.memory_space<vmem>>, vector<8x32xbf16>,
        %c7_i32 = arith.constant 7 : i32
        %57 = arith.subi %c7_i32, %arg22 : i32
        %c8_i32_26 = arith.constant 8 : i32
        %58 = arith.muli %57, %c8_i32_26 : i32
        %59 = tpu.assume_multiple %58, 8 : i32
        %60 = arith.index_cast %59 : i32 to index
        %c128 = arith.constant 128 : index
        %61 = vector.load %alloca[%60, %c128] : memref<64x256xbf16, #tpu.memory_space<vmem>>, vector<8x128xbf16>
        %62 = arith.extf %61 : vector<8x128xbf16> to vector<8x128xf32>
        %63 = arith.truncf %arg25 : vector<8x32xf32> to vector<8x32xbf16>
        %cst_27 = arith.constant dense<0.000000e+00> : vector<8x128xf32>
        %64 = tpu.matmul %63, %9, %cst_27 {dimension_numbers = #tpu.dot_dimension_numbers<[1], [0], [0], [1], [0, 0, 1, 1], [], []>} : vector<8x32xbf16>, vector<32x128xbf16>, vector<8x128xf32> -> vector<8x128xf32>
        %65 = arith.addf %62, %64 : vector<8x128xf32>
        %66 = vector.extract_strided_slice %65 {offsets = [0, 0], sizes = [8, 32], strides = [1, 1]} : vector<8x128xf32> to vector<8x32xf32>
        %67 = arith.negf %66 : vector<8x32xf32>
        %68 = math.exp %67 : vector<8x32xf32>
        %cst_28 = arith.constant 1.000000e+00 : f32
        %69 = vector.broadcast %cst_28 : f32 to vector<8x32xf32>
        %70 = arith.addf %69, %68 : vector<8x32xf32>
        %71 = arith.divf %69, %70 : vector<8x32xf32>
        %72 = vector.extract_strided_slice %65 {offsets = [0, 32], sizes = [8, 32], strides = [1, 1]} : vector<8x128xf32> to vector<8x32xf32>
        %73 = arith.negf %72 : vector<8x32xf32>
        %74 = math.exp %73 : vector<8x32xf32>
        %cst_29 = arith.constant 1.000000e+00 : f32
        %75 = vector.broadcast %cst_29 : f32 to vector<8x32xf32>
        %76 = arith.addf %75, %74 : vector<8x32xf32>
        %77 = arith.divf %75, %76 : vector<8x32xf32>
        %78 = vector.extract_strided_slice %65 {offsets = [0, 64], sizes = [8, 32], strides = [1, 1]} : vector<8x128xf32> to vector<8x32xf32>
        %79 = math.tanh %78 : vector<8x32xf32>
        %80 = vector.extract_strided_slice %65 {offsets = [0, 96], sizes = [8, 32], strides = [1, 1]} : vector<8x128xf32> to vector<8x32xf32>
        %81 = arith.negf %80 : vector<8x32xf32>
        %82 = math.exp %81 : vector<8x32xf32>
        %cst_30 = arith.constant 1.000000e+00 : f32
        %83 = vector.broadcast %cst_30 : f32 to vector<8x32xf32>
        %84 = arith.addf %83, %82 : vector<8x32xf32>
        %85 = arith.divf %83, %84 : vector<8x32xf32>
        %86 = arith.mulf %77, %arg26 : vector<8x32xf32>
        %87 = arith.mulf %71, %79 : vector<8x32xf32>
        %88 = arith.addf %86, %87 : vector<8x32xf32>
        %89 = math.tanh %88 : vector<8x32xf32>
        %90 = arith.mulf %85, %89 : vector<8x32xf32>
        %91 = arith.truncf %90 : vector<8x32xf32> to vector<8x32xbf16>
        %92 = arith.index_cast %59 : i32 to index
        %c0_31 = arith.constant 0 : index
        %93 = vector.load %arg16[%92, %c0_31] : memref<64x32xbf16, #tpu.memory_space<vmem>>, vector<8x32xbf16>
        tpu.vector_store %arg16[%92, %c0_31], %91 {strides = array<i32>} : memref<64x32xbf16, #tpu.memory_space<vmem>>, vector<8x32xbf16>,
        scf.yield %53, %51, %90, %88 : vector<8x32xf32>, vector<8x32xf32>, vector<8x32xf32>, vector<8x32xf32>
      }
      %c8_i32_18 = arith.constant 8 : i32
      tpu.yield
    }) : () -> ()
    %c0_i32_3 = arith.constant 0 : i32
    %c1_i32_4 = arith.constant 1 : i32
    %c2_i32_5 = arith.constant 2 : i32
    %c3_i32_6 = arith.constant 3 : i32
    "tpu.region"() ({
      %alloca = memref.alloca() : memref<64x128xbf16, #tpu.memory_space<vmem>>
      %alloca_7 = memref.alloca() : memref<64x32xbf16, #tpu.memory_space<vmem>>
      %11 = tpu.memref_slice %arg21[%c0_i32_3] : memref<4x!tpu.dma_semaphore, #tpu.memory_space<semaphore_mem>> -> memref<1x!tpu.dma_semaphore, #tpu.memory_space<semaphore_mem>>
      %12 = tpu.memref_squeeze %11 : memref<1x!tpu.dma_semaphore, #tpu.memory_space<semaphore_mem>> -> memref<!tpu.dma_semaphore, #tpu.memory_space<semaphore_mem>>
      tpu.wait_dma2 semaphore(%12 : memref<!tpu.dma_semaphore, #tpu.memory_space<semaphore_mem>>) src(%arg10 : memref<64x128xbf16, #tpu.memory_space<any>>) dst(%arg17 : memref<64x128xbf16, #tpu.memory_space<vmem>>)
      %c0_8 = arith.constant 0 : index
      %c0_9 = arith.constant 0 : index
      %13 = vector.load %arg17[%c0_8, %c0_9] : memref<64x128xbf16, #tpu.memory_space<vmem>>, vector<64x128xbf16>
      %c0_10 = arith.constant 0 : index
      %c0_11 = arith.constant 0 : index
      %14 = vector.load %arg15[%c0_10, %c0_11] : memref<64x32xbf16, #tpu.memory_space<vmem>>, vector<64x32xbf16>
      %15 = vector.extract_strided_slice %13 {offsets = [0, 0], sizes = [32, 128], strides = [1, 1]} : vector<64x128xbf16> to vector<32x128xbf16>
      %cst_12 = arith.constant dense<0.000000e+00> : vector<64x128xf32>
      %16 = tpu.matmul %14, %15, %cst_12 {dimension_numbers = #tpu.dot_dimension_numbers<[1], [0], [0], [1], [0, 0, 1, 1], [], []>} : vector<64x32xbf16>, vector<32x128xbf16>, vector<64x128xf32> -> vector<64x128xf32>
      %c0_13 = arith.constant 0 : index
      %c0_14 = arith.constant 0 : index
      %17 = vector.load %arg16[%c0_13, %c0_14] : memref<64x32xbf16, #tpu.memory_space<vmem>>, vector<64x32xbf16>
      %18 = vector.extract_strided_slice %13 {offsets = [32, 0], sizes = [32, 128], strides = [1, 1]} : vector<64x128xbf16> to vector<32x128xbf16>
      %cst_15 = arith.constant dense<0.000000e+00> : vector<64x128xf32>
      %19 = tpu.matmul %17, %18, %cst_15 {dimension_numbers = #tpu.dot_dimension_numbers<[1], [0], [0], [1], [0, 0, 1, 1], [], []>} : vector<64x32xbf16>, vector<32x128xbf16>, vector<64x128xf32> -> vector<64x128xf32>
      %20 = arith.addf %16, %19 : vector<64x128xf32>
      %c0_16 = arith.constant 0 : index
      %c0_17 = arith.constant 0 : index
      %21 = vector.load %arg7[%c0_16, %c0_17] : memref<1x128xf32, #tpu.memory_space<vmem>>, vector<1x128xf32>
      %22 = vector.broadcast %21 : vector<1x128xf32> to vector<64x128xf32>
      %23 = arith.addf %20, %22 : vector<64x128xf32>
      %24 = arith.truncf %23 : vector<64x128xf32> to vector<64x128xbf16>
      %c0_18 = arith.constant 0 : index
      %c0_19 = arith.constant 0 : index
      %25 = vector.load %alloca[%c0_18, %c0_19] : memref<64x128xbf16, #tpu.memory_space<vmem>>, vector<64x128xbf16>
      tpu.vector_store %alloca[%c0_18, %c0_19], %24 {strides = array<i32>} : memref<64x128xbf16, #tpu.memory_space<vmem>>, vector<64x128xbf16>,
      %26 = tpu.memref_slice %arg21[%c1_i32_4] : memref<4x!tpu.dma_semaphore, #tpu.memory_space<semaphore_mem>> -> memref<1x!tpu.dma_semaphore, #tpu.memory_space<semaphore_mem>>
      %27 = tpu.memref_squeeze %26 : memref<1x!tpu.dma_semaphore, #tpu.memory_space<semaphore_mem>> -> memref<!tpu.dma_semaphore, #tpu.memory_space<semaphore_mem>>
      tpu.wait_dma2 semaphore(%27 : memref<!tpu.dma_semaphore, #tpu.memory_space<semaphore_mem>>) src(%arg11 : memref<32x256xbf16, #tpu.memory_space<any>>) dst(%arg18 : memref<32x256xbf16, #tpu.memory_space<vmem>>)
      %28 = tpu.memref_slice %arg21[%c2_i32_5] : memref<4x!tpu.dma_semaphore, #tpu.memory_space<semaphore_mem>> -> memref<1x!tpu.dma_semaphore, #tpu.memory_space<semaphore_mem>>
      %29 = tpu.memref_squeeze %28 : memref<1x!tpu.dma_semaphore, #tpu.memory_space<semaphore_mem>> -> memref<!tpu.dma_semaphore, #tpu.memory_space<semaphore_mem>>
      tpu.wait_dma2 semaphore(%29 : memref<!tpu.dma_semaphore, #tpu.memory_space<semaphore_mem>>) src(%arg12 : memref<32x128xbf16, #tpu.memory_space<any>>) dst(%arg19 : memref<32x128xbf16, #tpu.memory_space<vmem>>)
      %c0_20 = arith.constant 0 : index
      %c0_21 = arith.constant 0 : index
      %30 = vector.load %arg6[%c0_20, %c0_21] : memref<32x128xbf16, #tpu.memory_space<vmem>>, vector<32x128xbf16>
      %c0_22 = arith.constant 0 : index
      %c0_23 = arith.constant 0 : index
      %31 = vector.load %arg18[%c0_22, %c0_23] : memref<32x256xbf16, #tpu.memory_space<vmem>>, vector<32x256xbf16>
      %c0_24 = arith.constant 0 : index
      %c0_25 = arith.constant 0 : index
      %32 = vector.load %arg19[%c0_24, %c0_25] : memref<32x128xbf16, #tpu.memory_space<vmem>>, vector<32x128xbf16>
      %c0_26 = arith.constant 0 : index
      %c0_27 = arith.constant 0 : index
      %33 = vector.load %arg8[%c0_26, %c0_27] : memref<1x128xf32, #tpu.memory_space<vmem>>, vector<1x128xf32>
      %34 = vector.shape_cast %33 : vector<1x128xf32> to vector<1x128xf32>
      %35 = vector.broadcast %34 : vector<1x128xf32> to vector<8x128xf32>
      %cst_28 = arith.constant 0.000000e+00 : bf16
      %36 = vector.broadcast %cst_28 : bf16 to vector<8x32xbf16>
      %c0_29 = arith.constant 0 : index
      %c0_30 = arith.constant 0 : index
      %37 = vector.load %alloca_7[%c0_29, %c0_30] : memref<64x32xbf16, #tpu.memory_space<vmem>>, vector<8x32xbf16>
      tpu.vector_store %alloca_7[%c0_29, %c0_30], %36 {strides = array<i32>} : memref<64x32xbf16, #tpu.memory_space<vmem>>, vector<8x32xbf16>,
      %cst_31 = arith.constant 0.000000e+00 : f32
      %38 = vector.broadcast %cst_31 : f32 to vector<8x128xf32>
      %c1_i32_32 = arith.constant 1 : i32
      %c7_i32 = arith.constant 7 : i32
      %39 = arith.addi %c1_i32_32, %c7_i32 : i32
      %c1_i32_33 = arith.constant 1 : i32
      %40:5 = scf.for %arg22 = %c1_i32_32 to %39 step %c1_i32_33 iter_args(%arg23 = %10, %arg24 = %10, %arg25 = %10, %arg26 = %10, %arg27 = %38) -> (vector<8x32xf32>, vector<8x32xf32>, vector<8x32xf32>, vector<8x32xf32>, vector<8x128xf32>)  : i32 {
        %c1_i32_50 = arith.constant 1 : i32
        %59 = arith.subi %arg22, %c1_i32_50 : i32
        %c8_i32 = arith.constant 8 : i32
        %60 = arith.muli %59, %c8_i32 : i32
        %61 = tpu.assume_multiple %60, 8 : i32
        %c8_i32_51 = arith.constant 8 : i32
        %62 = arith.muli %arg22, %c8_i32_51 : i32
        %63 = tpu.assume_multiple %62, 8 : i32
        %64 = arith.index_cast %61 : i32 to index
        %c0_52 = arith.constant 0 : index
        %65 = vector.load %alloca[%64, %c0_52] : memref<64x128xbf16, #tpu.memory_space<vmem>>, vector<8x128xbf16>
        %66 = arith.extf %65 : vector<8x128xbf16> to vector<8x128xf32>
        %67 = arith.truncf %arg23 : vector<8x32xf32> to vector<8x32xbf16>
        %cst_53 = arith.constant dense<0.000000e+00> : vector<8x128xf32>
        %68 = tpu.matmul %67, %30, %cst_53 {dimension_numbers = #tpu.dot_dimension_numbers<[1], [0], [0], [1], [0, 0, 1, 1], [], []>} : vector<8x32xbf16>, vector<32x128xbf16>, vector<8x128xf32> -> vector<8x128xf32>
        %69 = arith.addf %66, %68 : vector<8x128xf32>
        %70 = vector.extract_strided_slice %69 {offsets = [0, 0], sizes = [8, 32], strides = [1, 1]} : vector<8x128xf32> to vector<8x32xf32>
        %71 = arith.negf %70 : vector<8x32xf32>
        %72 = math.exp %71 : vector<8x32xf32>
        %cst_54 = arith.constant 1.000000e+00 : f32
        %73 = vector.broadcast %cst_54 : f32 to vector<8x32xf32>
        %74 = arith.addf %73, %72 : vector<8x32xf32>
        %75 = arith.divf %73, %74 : vector<8x32xf32>
        %76 = vector.extract_strided_slice %69 {offsets = [0, 32], sizes = [8, 32], strides = [1, 1]} : vector<8x128xf32> to vector<8x32xf32>
        %77 = arith.negf %76 : vector<8x32xf32>
        %78 = math.exp %77 : vector<8x32xf32>
        %cst_55 = arith.constant 1.000000e+00 : f32
        %79 = vector.broadcast %cst_55 : f32 to vector<8x32xf32>
        %80 = arith.addf %79, %78 : vector<8x32xf32>
        %81 = arith.divf %79, %80 : vector<8x32xf32>
        %82 = vector.extract_strided_slice %69 {offsets = [0, 64], sizes = [8, 32], strides = [1, 1]} : vector<8x128xf32> to vector<8x32xf32>
        %83 = math.tanh %82 : vector<8x32xf32>
        %84 = vector.extract_strided_slice %69 {offsets = [0, 96], sizes = [8, 32], strides = [1, 1]} : vector<8x128xf32> to vector<8x32xf32>
        %85 = arith.negf %84 : vector<8x32xf32>
        %86 = math.exp %85 : vector<8x32xf32>
        %cst_56 = arith.constant 1.000000e+00 : f32
        %87 = vector.broadcast %cst_56 : f32 to vector<8x32xf32>
        %88 = arith.addf %87, %86 : vector<8x32xf32>
        %89 = arith.divf %87, %88 : vector<8x32xf32>
        %90 = arith.mulf %81, %arg24 : vector<8x32xf32>
        %91 = arith.mulf %75, %83 : vector<8x32xf32>
        %92 = arith.addf %90, %91 : vector<8x32xf32>
        %93 = math.tanh %92 : vector<8x32xf32>
        %94 = arith.mulf %89, %93 : vector<8x32xf32>
        %95 = arith.truncf %94 : vector<8x32xf32> to vector<8x32xbf16>
        %cst_57 = arith.constant dense<0.000000e+00> : vector<8x256xf32>
        %96 = tpu.matmul %95, %31, %cst_57 {dimension_numbers = #tpu.dot_dimension_numbers<[1], [0], [0], [1], [0, 0, 1, 1], [], []>} : vector<8x32xbf16>, vector<32x256xbf16>, vector<8x256xf32> -> vector<8x256xf32>
        %97 = vector.extract_strided_slice %96 {offsets = [0, 0], sizes = [8, 128], strides = [1, 1]} : vector<8x256xf32> to vector<8x128xf32>
        %98 = arith.addf %97, %arg27 : vector<8x128xf32>
        %99 = arith.addf %98, %35 : vector<8x128xf32>
        %100 = arith.truncf %arg25 : vector<8x32xf32> to vector<8x32xbf16>
        %cst_58 = arith.constant dense<0.000000e+00> : vector<8x128xf32>
        %101 = tpu.matmul %100, %32, %cst_58 {dimension_numbers = #tpu.dot_dimension_numbers<[1], [0], [0], [1], [0, 0, 1, 1], [], []>} : vector<8x32xbf16>, vector<32x128xbf16>, vector<8x128xf32> -> vector<8x128xf32>
        %102 = arith.addf %99, %101 : vector<8x128xf32>
        %103 = vector.extract_strided_slice %102 {offsets = [0, 0], sizes = [8, 32], strides = [1, 1]} : vector<8x128xf32> to vector<8x32xf32>
        %104 = arith.negf %103 : vector<8x32xf32>
        %105 = math.exp %104 : vector<8x32xf32>
        %cst_59 = arith.constant 1.000000e+00 : f32
        %106 = vector.broadcast %cst_59 : f32 to vector<8x32xf32>
        %107 = arith.addf %106, %105 : vector<8x32xf32>
        %108 = arith.divf %106, %107 : vector<8x32xf32>
        %109 = vector.extract_strided_slice %102 {offsets = [0, 32], sizes = [8, 32], strides = [1, 1]} : vector<8x128xf32> to vector<8x32xf32>
        %110 = arith.negf %109 : vector<8x32xf32>
        %111 = math.exp %110 : vector<8x32xf32>
        %cst_60 = arith.constant 1.000000e+00 : f32
        %112 = vector.broadcast %cst_60 : f32 to vector<8x32xf32>
        %113 = arith.addf %112, %111 : vector<8x32xf32>
        %114 = arith.divf %112, %113 : vector<8x32xf32>
        %115 = vector.extract_strided_slice %102 {offsets = [0, 64], sizes = [8, 32], strides = [1, 1]} : vector<8x128xf32> to vector<8x32xf32>
        %116 = math.tanh %115 : vector<8x32xf32>
        %117 = vector.extract_strided_slice %102 {offsets = [0, 96], sizes = [8, 32], strides = [1, 1]} : vector<8x128xf32> to vector<8x32xf32>
        %118 = arith.negf %117 : vector<8x32xf32>
        %119 = math.exp %118 : vector<8x32xf32>
        %cst_61 = arith.constant 1.000000e+00 : f32
        %120 = vector.broadcast %cst_61 : f32 to vector<8x32xf32>
        %121 = arith.addf %120, %119 : vector<8x32xf32>
        %122 = arith.divf %120, %121 : vector<8x32xf32>
        %123 = arith.mulf %114, %arg26 : vector<8x32xf32>
        %124 = arith.mulf %108, %116 : vector<8x32xf32>
        %125 = arith.addf %123, %124 : vector<8x32xf32>
        %126 = math.tanh %125 : vector<8x32xf32>
        %127 = arith.mulf %122, %126 : vector<8x32xf32>
        %128 = arith.truncf %127 : vector<8x32xf32> to vector<8x32xbf16>
        %129 = arith.index_cast %63 : i32 to index
        %c0_62 = arith.constant 0 : index
        %130 = vector.load %alloca_7[%129, %c0_62] : memref<64x32xbf16, #tpu.memory_space<vmem>>, vector<8x32xbf16>
        tpu.vector_store %alloca_7[%129, %c0_62], %128 {strides = array<i32>} : memref<64x32xbf16, #tpu.memory_space<vmem>>, vector<8x32xbf16>,
        %131 = arith.index_cast %63 : i32 to index
        %c0_63 = arith.constant 0 : index
        %132 = vector.load %arg1[%131, %c0_63] : memref<64x1xi32, #tpu.memory_space<vmem>>, vector<8x1xi32>
        %c0_i32_64 = arith.constant 0 : i32
        %133 = vector.broadcast %c0_i32_64 : i32 to vector<8x1xi32>
        %134 = arith.cmpi eq, %132, %133 : vector<8x1xi32>
        %cst_65 = arith.constant 0.000000e+00 : f32
        %135 = vector.shape_cast %134 : vector<8x1xi1> to vector<8x1xi1>
        %136 = vector.broadcast %135 : vector<8x1xi1> to vector<8x32xi1>
        %137 = vector.broadcast %cst_65 : f32 to vector<8x32xf32>
        %138 = arith.select %136, %94, %137 : vector<8x32xi1>, vector<8x32xf32>
        %cst_66 = arith.constant 0.000000e+00 : f32
        %139 = vector.shape_cast %134 : vector<8x1xi1> to vector<8x1xi1>
        %140 = vector.broadcast %139 : vector<8x1xi1> to vector<8x32xi1>
        %141 = vector.broadcast %cst_66 : f32 to vector<8x32xf32>
        %142 = arith.select %140, %92, %141 : vector<8x32xi1>, vector<8x32xf32>
        %143 = vector.extract_strided_slice %96 {offsets = [0, 128], sizes = [8, 128], strides = [1, 1]} : vector<8x256xf32> to vector<8x128xf32>
        %cst_67 = arith.constant 0.000000e+00 : f32
        %144 = vector.shape_cast %134 : vector<8x1xi1> to vector<8x1xi1>
        %145 = vector.broadcast %144 : vector<8x1xi1> to vector<8x128xi1>
        %146 = vector.broadcast %cst_67 : f32 to vector<8x128xf32>
        %147 = arith.select %145, %143, %146 : vector<8x128xi1>, vector<8x128xf32>
        %148 = vector.shape_cast %134 : vector<8x1xi1> to vector<8x1xi1>
        %149 = vector.broadcast %148 : vector<8x1xi1> to vector<8x32xi1>
        %150 = arith.select %149, %arg25, %127 : vector<8x32xi1>, vector<8x32xf32>
        %151 = vector.shape_cast %134 : vector<8x1xi1> to vector<8x1xi1>
        %152 = vector.broadcast %151 : vector<8x1xi1> to vector<8x32xi1>
        %153 = arith.select %152, %arg26, %125 : vector<8x32xi1>, vector<8x32xf32>
        scf.yield %138, %142, %150, %153, %147 : vector<8x32xf32>, vector<8x32xf32>, vector<8x32xf32>, vector<8x32xf32>, vector<8x128xf32>
      }
      %c7_i32_34 = arith.constant 7 : i32
      %41 = tpu.memref_slice %arg21[%c3_i32_6] : memref<4x!tpu.dma_semaphore, #tpu.memory_space<semaphore_mem>> -> memref<1x!tpu.dma_semaphore, #tpu.memory_space<semaphore_mem>>
      %42 = tpu.memref_squeeze %41 : memref<1x!tpu.dma_semaphore, #tpu.memory_space<semaphore_mem>> -> memref<!tpu.dma_semaphore, #tpu.memory_space<semaphore_mem>>
      tpu.wait_dma2 semaphore(%42 : memref<!tpu.dma_semaphore, #tpu.memory_space<semaphore_mem>>) src(%arg13 : memref<96x128xbf16, #tpu.memory_space<any>>) dst(%arg20 : memref<96x128xbf16, #tpu.memory_space<vmem>>)
      %c0_35 = arith.constant 0 : index
      %c0_36 = arith.constant 0 : index
      %43 = vector.load %arg20[%c0_35, %c0_36] : memref<96x128xbf16, #tpu.memory_space<vmem>>, vector<96x128xbf16>
      %c0_37 = arith.constant 0 : index
      %c0_38 = arith.constant 0 : index
      %44 = vector.load %alloca_7[%c0_37, %c0_38] : memref<64x32xbf16, #tpu.memory_space<vmem>>, vector<64x32xbf16>
      %45 = vector.extract_strided_slice %43 {offsets = [0, 0], sizes = [32, 128], strides = [1, 1]} : vector<96x128xbf16> to vector<32x128xbf16>
      %cst_39 = arith.constant dense<0.000000e+00> : vector<64x128xf32>
      %46 = tpu.matmul %44, %45, %cst_39 {dimension_numbers = #tpu.dot_dimension_numbers<[1], [0], [0], [1], [0, 0, 1, 1], [], []>} : vector<64x32xbf16>, vector<32x128xbf16>, vector<64x128xf32> -> vector<64x128xf32>
      %c0_40 = arith.constant 0 : index
      %c0_41 = arith.constant 0 : index
      %47 = vector.load %arg15[%c0_40, %c0_41] : memref<64x32xbf16, #tpu.memory_space<vmem>>, vector<64x32xbf16>
      %48 = vector.extract_strided_slice %43 {offsets = [32, 0], sizes = [32, 128], strides = [1, 1]} : vector<96x128xbf16> to vector<32x128xbf16>
      %cst_42 = arith.constant dense<0.000000e+00> : vector<64x128xf32>
      %49 = tpu.matmul %47, %48, %cst_42 {dimension_numbers = #tpu.dot_dimension_numbers<[1], [0], [0], [1], [0, 0, 1, 1], [], []>} : vector<64x32xbf16>, vector<32x128xbf16>, vector<64x128xf32> -> vector<64x128xf32>
      %50 = arith.addf %46, %49 : vector<64x128xf32>
      %c0_43 = arith.constant 0 : index
      %c0_44 = arith.constant 0 : index
      %51 = vector.load %arg16[%c0_43, %c0_44] : memref<64x32xbf16, #tpu.memory_space<vmem>>, vector<64x32xbf16>
      %52 = vector.extract_strided_slice %43 {offsets = [64, 0], sizes = [32, 128], strides = [1, 1]} : vector<96x128xbf16> to vector<32x128xbf16>
      %cst_45 = arith.constant dense<0.000000e+00> : vector<64x128xf32>
      %53 = tpu.matmul %51, %52, %cst_45 {dimension_numbers = #tpu.dot_dimension_numbers<[1], [0], [0], [1], [0, 0, 1, 1], [], []>} : vector<64x32xbf16>, vector<32x128xbf16>, vector<64x128xf32> -> vector<64x128xf32>
      %54 = arith.addf %50, %53 : vector<64x128xf32>
      %c0_46 = arith.constant 0 : index
      %c0_47 = arith.constant 0 : index
      %55 = vector.load %arg9[%c0_46, %c0_47] : memref<1x128xf32, #tpu.memory_space<vmem>>, vector<1x128xf32>
      %56 = vector.broadcast %55 : vector<1x128xf32> to vector<64x128xf32>
      %57 = arith.addf %54, %56 : vector<64x128xf32>
      %c0_48 = arith.constant 0 : index
      %c0_49 = arith.constant 0 : index
      %58 = vector.load %arg14[%c0_48, %c0_49] : memref<64x128xf32, #tpu.memory_space<vmem>>, vector<64x128xf32>
      tpu.vector_store %arg14[%c0_48, %c0_49], %57 {strides = array<i32>} : memref<64x128xf32, #tpu.memory_space<vmem>>, vector<64x128xf32>,
      tpu.yield
    }) : () -> ()
    return
  }
}

</mosaic_0001>

<llo_original>
// kernel: bert_stack_segmentor_forward.1
$region0: #{bert_stack_segmentor_forward.1}
  #allocation0 [shape = 'u32[]', space=smem, size = 0x4, offset = 0x4, fixed_abs, tag = 'smem constant byte address 0x4 - core index']
  #allocation1 [shape = 'u32[72,128]{1,0:T(1,128)}', space=vmem, size = 0x9000, scoped, tag = 'internal scratch']
  #allocation2 [shape = 'bf16[64,32]{1,0:T(8,128)(2,1)}', space=vmem, size = 0x4000, scoped, tag = 'scratch operand']
  #allocation3 [shape = 'bf16[64,32]{1,0:T(8,128)(2,1)}', space=vmem, size = 0x4000, scoped, tag = 'scratch operand']
  #allocation4 [shape = 'bf16[64,128]{1,0:T(8,128)(2,1)}', space=vmem, size = 0x4000, scoped, tag = 'scratch operand']
  #allocation5 [shape = 'bf16[32,256]{1,0:T(8,128)(2,1)}', space=vmem, size = 0x4000, scoped, tag = 'scratch operand']
  #allocation6 [shape = 'bf16[32,128]{1,0:T(8,128)(2,1)}', space=vmem, size = 0x2000, scoped, tag = 'scratch operand']
  #allocation7 [shape = 'bf16[96,128]{1,0:T(8,128)(2,1)}', space=vmem, size = 0x6000, scoped, tag = 'scratch operand']
  #allocation8 [shape = 's32[4]{0}', space=sflag, size = 0x10, scoped, tag = 'scratch operand']
  #allocation9 [shape = 's32[]', space=sflag, size = 0x4, offset = 0, fixed_abs, tag = 'sflag constant byte address 0x0 - dummy sync flag']
  #allocation10 [shape = 's32[]', space=sflag, size = 0x4, offset = 0, fixed_abs, tag = 'sflag constant byte address 0x0 - dummy sync flag']
  #allocation11 [shape = 's32[]', space=sflag, size = 0x4, offset = 0, fixed_abs, tag = 'sflag constant byte address 0x0 - dummy sync flag']
  #allocation12 [shape = 's32[]', space=sflag, size = 0x4, offset = 0, fixed_abs, tag = 'sflag constant byte address 0x0 - dummy sync flag']
  %s0 = inlined_call_operand.vmem [shape: bf16[64,32], index: 0, kind: input, shape index: {}]
  %s1 = inlined_call_operand.vmem [shape: s32[64,1], index: 1, kind: input, shape index: {}]
  %s2 = inlined_call_operand.vmem [shape: bf16[32,256], index: 2, kind: input, shape index: {}]
  %s3 = inlined_call_operand.vmem [shape: bf16[32,128], index: 3, kind: input, shape index: {}]
  %s4 = inlined_call_operand.vmem [shape: bf16[32,128], index: 4, kind: input, shape index: {}]
  %s5 = inlined_call_operand.vmem [shape: f32[1,256], index: 5, kind: input, shape index: {}]
  %s6 = inlined_call_operand.vmem [shape: bf16[32,128], index: 6, kind: input, shape index: {}]
  %s7 = inlined_call_operand.vmem [shape: f32[1,128], index: 7, kind: input, shape index: {}]
  %s8 = inlined_call_operand.vmem [shape: f32[1,128], index: 8, kind: input, shape index: {}]
  %s9 = inlined_call_operand.vmem [shape: f32[1,128], index: 9, kind: input, shape index: {}]
  %s10 = inlined_call_operand.vmem [shape: bf16[64,128], index: 10, kind: input, shape index: {}]
  %s11 = inlined_call_operand.vmem [shape: bf16[32,256], index: 11, kind: input, shape index: {}]
  %s12 = inlined_call_operand.vmem [shape: bf16[32,128], index: 12, kind: input, shape index: {}]
  %s13 = inlined_call_operand.vmem [shape: bf16[96,128], index: 13, kind: input, shape index: {}]
  %s14 = inlined_call_operand.vmem [shape: f32[64,128], index: 14, kind: output, shape index: {}]
  %s15 = sld [smem:[#allocation0]]
  $region142: #{bert_stack_segmentor_forward.1} parent=0
    _
  %s17 = ssub.s32 1, %s15
  %s18 = scalar_select 0, %s17, %s15
  // Predicated region
  $region2: #{bert_stack_segmentor_forward.1} parent=0 // pred_check
    _
  $region3: #{bert_stack_segmentor_forward.1} parent=0 // pred_check_branch
    %20 = sbr.rel (0) target = $region5
  $region4: #{bert_stack_segmentor_forward.1} parent=0 // pred_region
    _
  $region5: #{bert_stack_segmentor_forward.1} parent=0 // pred_fallthru
    _
  // Predicated region
  $region6: #{bert_stack_segmentor_forward.1} parent=0 // pred_check
    _
  $region7: #{bert_stack_segmentor_forward.1} parent=0 // pred_check_branch
    %22 = sbr.rel (0) target = $region9
  $region8: #{bert_stack_segmentor_forward.1} parent=0 // pred_region
    _
  $region9: #{bert_stack_segmentor_forward.1} parent=0 // pred_fallthru
    _
  // Predicated region
  $region10: #{bert_stack_segmentor_forward.1} parent=0 // pred_check
    _
  $region11: #{bert_stack_segmentor_forward.1} parent=0 // pred_check_branch
    %24 = sbr.rel (0) target = $region13
  $region12: #{bert_stack_segmentor_forward.1} parent=0 // pred_region
    _
  $region13: #{bert_stack_segmentor_forward.1} parent=0 // pred_fallthru
    _
  // Predicated region
  $region14: #{bert_stack_segmentor_forward.1} parent=0 // pred_check
    _
  $region15: #{bert_stack_segmentor_forward.1} parent=0 // pred_check_branch
    %26 = sbr.rel (0) target = $region17
  $region16: #{bert_stack_segmentor_forward.1} parent=0 // pred_region
    _
  $region17: #{bert_stack_segmentor_forward.1} parent=0 // pred_fallthru
    _
  // Predicated region
  $region18: #{bert_stack_segmentor_forward.1} parent=0 // pred_check
    _
  $region19: #{bert_stack_segmentor_forward.1} parent=0 // pred_check_branch
    %28 = sbr.rel (0) target = $region21
  $region20: #{bert_stack_segmentor_forward.1} parent=0 // pred_region
    _
  $region21: #{bert_stack_segmentor_forward.1} parent=0 // pred_fallthru
    _
  // Predicated region
  $region22: #{bert_stack_segmentor_forward.1} parent=0 // pred_check
    _
  $region23: #{bert_stack_segmentor_forward.1} parent=0 // pred_check_branch
    %30 = sbr.rel (0) target = $region25
  $region24: #{bert_stack_segmentor_forward.1} parent=0 // pred_region
    _
  $region25: #{bert_stack_segmentor_forward.1} parent=0 // pred_fallthru
    _
  // Predicated region
  $region26: #{bert_stack_segmentor_forward.1} parent=0 // pred_check
    _
  $region27: #{bert_stack_segmentor_forward.1} parent=0 // pred_check_branch
    %32 = sbr.rel (0) target = $region29
  $region28: #{bert_stack_segmentor_forward.1} parent=0 // pred_region
    _
  $region29: #{bert_stack_segmentor_forward.1} parent=0 // pred_fallthru
    _
  // Predicated region
  $region30: #{bert_stack_segmentor_forward.1} parent=0 // pred_check
    _
  $region31: #{bert_stack_segmentor_forward.1} parent=0 // pred_check_branch
    %34 = sbr.rel (0) target = $region33
  $region32: #{bert_stack_segmentor_forward.1} parent=0 // pred_region
    _
  $region33: #{bert_stack_segmentor_forward.1} parent=0 // pred_fallthru
    _
  // Predicated region
  $region34: #{bert_stack_segmentor_forward.1} parent=0 // pred_check
    _
  $region35: #{bert_stack_segmentor_forward.1} parent=0 // pred_check_branch
    %36 = sbr.rel (0) target = $region37
  $region36: #{bert_stack_segmentor_forward.1} parent=0 // pred_region
    _
  $region37: #{bert_stack_segmentor_forward.1} parent=0 // pred_fallthru
    _
  // Predicated region
  $region38: #{bert_stack_segmentor_forward.1} parent=0 // pred_check
    _
  $region39: #{bert_stack_segmentor_forward.1} parent=0 // pred_check_branch
    %38 = sbr.rel (0) target = $region41
  $region40: #{bert_stack_segmentor_forward.1} parent=0 // pred_region
    _
  $region41: #{bert_stack_segmentor_forward.1} parent=0 // pred_fallthru
    _
  // Predicated region
  $region42: #{bert_stack_segmentor_forward.1} parent=0 // pred_check
    _
  $region43: #{bert_stack_segmentor_forward.1} parent=0 // pred_check_branch
    %41 = sbr.rel (0) target = $region45
  $region44: #{bert_stack_segmentor_forward.1} parent=0 // pred_region
    loop: start=0, step=1, limit=1
    $region46: #{bert_stack_segmentor_forward.1} parent=44 // loop_pre_header
      _
    $region47: #{bert_stack_segmentor_forward.1} parent=44 // loop_header
      %s43 = sphi 0, %s47
      %p44 = scmp.ge.s32.totalorder %s43, 1
      %s48 = sphi %s10, %s10
      %s49 = sphi [#allocation4], [#allocation4]
    $region48: #{bert_stack_segmentor_forward.1} parent=44 // loop_header_branch
      %46 = sbr.rel (%p44) target = $region52
    $region49: #{bert_stack_segmentor_forward.1} parent=44 // loop_body
      %v50 = vld [vmem:[%s48] sm:$0xff]
      %51 = vst [vmem:[%s49] sm:$0xff] %v50
      %v52 = vld [vmem:[%s48 + $0x8] sm:$0xff]
      %53 = vst [vmem:[%s49 + $0x8] sm:$0xff] %v52
      %v54 = vld [vmem:[%s48 + $0x10] sm:$0xff]
      %55 = vst [vmem:[%s49 + $0x10] sm:$0xff] %v54
      %v56 = vld [vmem:[%s48 + $0x18] sm:$0xff]
      %57 = vst [vmem:[%s49 + $0x18] sm:$0xff] %v56
    $region50: #{bert_stack_segmentor_forward.1} parent=44 // loop_footer
      %s47 = sadd.s32 1, %s43
    $region51: #{bert_stack_segmentor_forward.1} parent=44 // loop_footer_branch
      %42 = sbr.rel target = $region47
    $region52: #{bert_stack_segmentor_forward.1} parent=44 // loop_exit
      _
  $region45: #{bert_stack_segmentor_forward.1} parent=0 // pred_fallthru
    _
  // Predicated region
  $region53: #{bert_stack_segmentor_forward.1} parent=0 // pred_check
    _
  $region54: #{bert_stack_segmentor_forward.1} parent=0 // pred_check_branch
    %59 = sbr.rel target = $region56
  $region55: #{bert_stack_segmentor_forward.1} parent=0 // pred_region
    _
  $region56: #{bert_stack_segmentor_forward.1} parent=0 // pred_fallthru
    _
  // Predicated region
  $region57: #{bert_stack_segmentor_forward.1} parent=0 // pred_check
    _
  $region58: #{bert_stack_segmentor_forward.1} parent=0 // pred_check_branch
    %62 = sbr.rel (0) target = $region60
  $region59: #{bert_stack_segmentor_forward.1} parent=0 // pred_region
    %63 = vsyncadd [#allocation8], 512
  $region60: #{bert_stack_segmentor_forward.1} parent=0 // pred_fallthru
    _
  %s64 = scalar_lea.sflag [#allocation8], 1
  // Predicated region
  $region61: #{bert_stack_segmentor_forward.1} parent=0 // pred_check
    _
  $region62: #{bert_stack_segmentor_forward.1} parent=0 // pred_check_branch
    %66 = sbr.rel (0) target = $region64
  $region63: #{bert_stack_segmentor_forward.1} parent=0 // pred_region
    loop: start=0, step=1, limit=1
    $region65: #{bert_stack_segmentor_forward.1} parent=63 // loop_pre_header
      _
    $region66: #{bert_stack_segmentor_forward.1} parent=63 // loop_header
      %s68 = sphi 0, %s72
      %p69 = scmp.ge.s32.totalorder %s68, 1
      %s73 = sphi %s11, %s11
      %s74 = sphi [#allocation5], [#allocation5]
    $region67: #{bert_stack_segmentor_forward.1} parent=63 // loop_header_branch
      %71 = sbr.rel (%p69) target = $region71
    $region68: #{bert_stack_segmentor_forward.1} parent=63 // loop_body
      %v75 = vld [vmem:[%s73] sm:$0xff]
      %76 = vst [vmem:[%s74] sm:$0xff] %v75
      %v77 = vld [vmem:[%s73 + $0x8] sm:$0xff]
      %78 = vst [vmem:[%s74 + $0x8] sm:$0xff] %v77
      %v79 = vld [vmem:[%s73 + $0x10] sm:$0xff]
      %80 = vst [vmem:[%s74 + $0x10] sm:$0xff] %v79
      %v81 = vld [vmem:[%s73 + $0x18] sm:$0xff]
      %82 = vst [vmem:[%s74 + $0x18] sm:$0xff] %v81
    $region69: #{bert_stack_segmentor_forward.1} parent=63 // loop_footer
      %s72 = sadd.s32 1, %s68
    $region70: #{bert_stack_segmentor_forward.1} parent=63 // loop_footer_branch
      %67 = sbr.rel target = $region66
    $region71: #{bert_stack_segmentor_forward.1} parent=63 // loop_exit
      _
  $region64: #{bert_stack_segmentor_forward.1} parent=0 // pred_fallthru
    _
  // Predicated region
  $region72: #{bert_stack_segmentor_forward.1} parent=0 // pred_check
    _
  $region73: #{bert_stack_segmentor_forward.1} parent=0 // pred_check_branch
    %84 = sbr.rel target = $region75
  $region74: #{bert_stack_segmentor_forward.1} parent=0 // pred_region
    _
  $region75: #{bert_stack_segmentor_forward.1} parent=0 // pred_fallthru
    _
  // Predicated region
  $region76: #{bert_stack_segmentor_forward.1} parent=0 // pred_check
    _
  $region77: #{bert_stack_segmentor_forward.1} parent=0 // pred_check_branch
    %87 = sbr.rel (0) target = $region79
  $region78: #{bert_stack_segmentor_forward.1} parent=0 // pred_region
    %88 = vsyncadd %s64, 512
  $region79: #{bert_stack_segmentor_forward.1} parent=0 // pred_fallthru
    _
  %s89 = scalar_lea.sflag [#allocation8], 2
  // Predicated region
  $region80: #{bert_stack_segmentor_forward.1} parent=0 // pred_check
    _
  $region81: #{bert_stack_segmentor_forward.1} parent=0 // pred_check_branch
    %91 = sbr.rel (0) target = $region83
  $region82: #{bert_stack_segmentor_forward.1} parent=0 // pred_region
    loop: start=0, step=1, limit=1
    $region84: #{bert_stack_segmentor_forward.1} parent=82 // loop_pre_header
      _
    $region85: #{bert_stack_segmentor_forward.1} parent=82 // loop_header
      %s93 = sphi 0, %s97
      %p94 = scmp.ge.s32.totalorder %s93, 1
      %s98 = sphi %s12, %s12
      %s99 = sphi [#allocation6], [#allocation6]
    $region86: #{bert_stack_segmentor_forward.1} parent=82 // loop_header_branch
      %96 = sbr.rel (%p94) target = $region90
    $region87: #{bert_stack_segmentor_forward.1} parent=82 // loop_body
      %v100 = vld [vmem:[%s98] sm:$0xff]
      %101 = vst [vmem:[%s99] sm:$0xff] %v100
      %v102 = vld [vmem:[%s98 + $0x8] sm:$0xff]
      %103 = vst [vmem:[%s99 + $0x8] sm:$0xff] %v102
    $region88: #{bert_stack_segmentor_forward.1} parent=82 // loop_footer
      %s97 = sadd.s32 1, %s93
    $region89: #{bert_stack_segmentor_forward.1} parent=82 // loop_footer_branch
      %92 = sbr.rel target = $region85
    $region90: #{bert_stack_segmentor_forward.1} parent=82 // loop_exit
      _
  $region83: #{bert_stack_segmentor_forward.1} parent=0 // pred_fallthru
    _
  // Predicated region
  $region91: #{bert_stack_segmentor_forward.1} parent=0 // pred_check
    _
  $region92: #{bert_stack_segmentor_forward.1} parent=0 // pred_check_branch
    %105 = sbr.rel target = $region94
  $region93: #{bert_stack_segmentor_forward.1} parent=0 // pred_region
    _
  $region94: #{bert_stack_segmentor_forward.1} parent=0 // pred_fallthru
    _
  // Predicated region
  $region95: #{bert_stack_segmentor_forward.1} parent=0 // pred_check
    _
  $region96: #{bert_stack_segmentor_forward.1} parent=0 // pred_check_branch
    %108 = sbr.rel (0) target = $region98
  $region97: #{bert_stack_segmentor_forward.1} parent=0 // pred_region
    %109 = vsyncadd %s89, 256
  $region98: #{bert_stack_segmentor_forward.1} parent=0 // pred_fallthru
    _
  %s110 = scalar_lea.sflag [#allocation8], 3
  // Predicated region
  $region99: #{bert_stack_segmentor_forward.1} parent=0 // pred_check
    _
  $region100: #{bert_stack_segmentor_forward.1} parent=0 // pred_check_branch
    %112 = sbr.rel (0) target = $region102
  $region101: #{bert_stack_segmentor_forward.1} parent=0 // pred_region
    loop: start=0, step=1, limit=1
    $region103: #{bert_stack_segmentor_forward.1} parent=101 // loop_pre_header
      _
    $region104: #{bert_stack_segmentor_forward.1} parent=101 // loop_header
      %s114 = sphi 0, %s118
      %p115 = scmp.ge.s32.totalorder %s114, 1
      %s119 = sphi %s13, %s13
      %s120 = sphi [#allocation7], [#allocation7]
    $region105: #{bert_stack_segmentor_forward.1} parent=101 // loop_header_branch
      %117 = sbr.rel (%p115) target = $region109
    $region106: #{bert_stack_segmentor_forward.1} parent=101 // loop_body
      %v121 = vld [vmem:[%s119] sm:$0xff]
      %122 = vst [vmem:[%s120] sm:$0xff] %v121
      %v123 = vld [vmem:[%s119 + $0x8] sm:$0xff]
      %124 = vst [vmem:[%s120 + $0x8] sm:$0xff] %v123
      %v125 = vld [vmem:[%s119 + $0x10] sm:$0xff]
      %126 = vst [vmem:[%s120 + $0x10] sm:$0xff] %v125
      %v127 = vld [vmem:[%s119 + $0x18] sm:$0xff]
      %128 = vst [vmem:[%s120 + $0x18] sm:$0xff] %v127
      %v129 = vld [vmem:[%s119 + $0x20] sm:$0xff]
      %130 = vst [vmem:[%s120 + $0x20] sm:$0xff] %v129
      %v131 = vld [vmem:[%s119 + $0x28] sm:$0xff]
      %132 = vst [vmem:[%s120 + $0x28] sm:$0xff] %v131
    $region107: #{bert_stack_segmentor_forward.1} parent=101 // loop_footer
      %s118 = sadd.s32 1, %s114
    $region108: #{bert_stack_segmentor_forward.1} parent=101 // loop_footer_branch
      %113 = sbr.rel target = $region104
    $region109: #{bert_stack_segmentor_forward.1} parent=101 // loop_exit
      _
  $region102: #{bert_stack_segmentor_forward.1} parent=0 // pred_fallthru
    _
  // Predicated region
  $region110: #{bert_stack_segmentor_forward.1} parent=0 // pred_check
    _
  $region111: #{bert_stack_segmentor_forward.1} parent=0 // pred_check_branch
    %134 = sbr.rel target = $region113
  $region112: #{bert_stack_segmentor_forward.1} parent=0 // pred_region
    _
  $region113: #{bert_stack_segmentor_forward.1} parent=0 // pred_fallthru
    _
  // Predicated region
  $region114: #{bert_stack_segmentor_forward.1} parent=0 // pred_check
    _
  $region115: #{bert_stack_segmentor_forward.1} parent=0 // pred_check_branch
    %137 = sbr.rel (0) target = $region117
  $region116: #{bert_stack_segmentor_forward.1} parent=0 // pred_region
    %138 = vsyncadd %s110, 768
  $region117: #{bert_stack_segmentor_forward.1} parent=0 // pred_fallthru
    _
  %v139 = vld [vmem:[%s3] sm:$0xf]
  %v140 = vld [vmem:[%s3 + $0x4] sm:$0xf]
  %v141 = vld [vmem:[%s3 + $0x8] sm:$0xf]
  %v142 = vld [vmem:[%s3 + $0xc] sm:$0xf]
  %v143 = vld [vmem:[%s4] sm:$0xf]
  %v144 = vld [vmem:[%s4 + $0x4] sm:$0xf]
  %v145 = vld [vmem:[%s4 + $0x8] sm:$0xf]
  %v146 = vld [vmem:[%s4 + $0xc] sm:$0xf]
  $region118: #{bert_stack_segmentor_forward.1} parent=0
    #allocation13 [shape = 'u8[32768]{0}', space=vmem, size = 0x8000, scoped, tag = 'scoped memory for bert_stack_segmentor_forward.1']
    %v147 = vld [vmem:[%s0] sm:$0xf]
    %v148 = vld [vmem:[%s0 + $0x4] sm:$0xf]
    %v149 = vld [vmem:[%s0 + $0x8] sm:$0xf]
    %v150 = vld [vmem:[%s0 + $0xc] sm:$0xf]
    %v151 = vld [vmem:[%s0 + $0x10] sm:$0xf]
    %v152 = vld [vmem:[%s0 + $0x14] sm:$0xf]
    %v153 = vld [vmem:[%s0 + $0x18] sm:$0xf]
    %v154 = vld [vmem:[%s0 + $0x1c] sm:$0xf]
    %v155 = vld [vmem:[%s2] sm:$0xff]
    %v156 = vld [vmem:[%s2 + $0x8] sm:$0xff]
    %v157 = vld [vmem:[%s2 + $0x10] sm:$0xff]
    %v158 = vld [vmem:[%s2 + $0x18] sm:$0xff]
    %v159 = vld [vmem:[%s5] sm:$0x3]
    %v161 = vperm.slane %v159, 0
    %v162 = vperm.slane %v159, 1
    %v173 = vunpack.c.l.b16 %v147
    %v174 = vunpack.c.l.b16 %v148
    %v175 = vunpack.c.l.b16 %v149
    %v176 = vunpack.c.l.b16 %v150
    %v177 = vunpack.c.l.b16 %v151
    %v178 = vunpack.c.l.b16 %v152
    %v179 = vunpack.c.l.b16 %v153
    %v180 = vunpack.c.l.b16 %v154
    %v181 = vpack.c.b16 %v174, %v173
    %v182 = vpack.c.b16 %v176, %v175
    %v183 = vpack.c.b16 %v178, %v177
    %v184 = vpack.c.b16 %v180, %v179
    %v189 = vunpack.c.l.b16 %v155
    %v190 = vunpack.c.h.b16 %v155
    %v191 = vunpack.c.l.b16 %v156
    %v192 = vunpack.c.h.b16 %v156
    %v193 = vunpack.c.l.b16 %v157
    %v194 = vunpack.c.h.b16 %v157
    %v195 = vunpack.c.l.b16 %v158
    %v196 = vunpack.c.h.b16 %v158
    %v197 = vpack.c.b16 %v191, %v189
    %v198 = vpack.c.b16 %v192, %v190
    %v199 = vpack.c.b16 %v195, %v193
    %v200 = vpack.c.b16 %v196, %v194
    %vm205 = vcmask 261120
    %v207 = vsel %vm205, %v181, 0
    %v210 = vsel %vm205, %v182, 0
    %v213 = vsel %vm205, %v183, 0
    %v216 = vsel %vm205, %v184, 0
    %218 = vmatpush.bf16.msra.mxu0 0
    %219 = vmatpush.bf16.msra.mxu0 0
    %220 = vmatpush.bf16.msra.mxu0 0
    %221 = vmatpush.bf16.msra.mxu0 0
    %222 = vmatpush.bf16.msra.mxu0 0
    %223 = vmatpush.bf16.msra.mxu0 0
    %224 = vmatpush.bf16.msra.mxu0 %v199
    %225 = vmatpush.bf16.msra.mxu0 %v197
    %226 = vmatmul.bf16.gmra.mxu0 %v207
    %v227 = vpop.f32.mrf.mxu0
    %v228 = vadd.f32 %v161, %v227
    %v229 = vpop.f32.mrf.mxu0
    %v230 = vadd.f32 %v161, %v229
    %231 = vmatmul.bf16.gmra.mxu0 %v210
    %v232 = vpop.f32.mrf.mxu0
    %v233 = vadd.f32 %v161, %v232
    %v234 = vpop.f32.mrf.mxu0
    %v235 = vadd.f32 %v161, %v234
    %236 = vmatmul.bf16.gmra.mxu0 %v213
    %v237 = vpop.f32.mrf.mxu0
    %v238 = vadd.f32 %v161, %v237
    %v239 = vpop.f32.mrf.mxu0
    %v240 = vadd.f32 %v161, %v239
    %241 = vmatmul.bf16.gmra.mxu0 %v216
    %v242 = vpop.f32.mrf.mxu0
    %v243 = vadd.f32 %v161, %v242
    %v244 = vpop.f32.mrf.mxu0
    %v245 = vadd.f32 %v161, %v244
    %246 = vdwg.mxu0
    %247 = vmatpush.bf16.msra.mxu0 0
    %248 = vmatpush.bf16.msra.mxu0 0
    %249 = vmatpush.bf16.msra.mxu0 0
    %250 = vmatpush.bf16.msra.mxu0 0
    %251 = vmatpush.bf16.msra.mxu0 0
    %252 = vmatpush.bf16.msra.mxu0 0
    %253 = vmatpush.bf16.msra.mxu0 %v200
    %254 = vmatpush.bf16.msra.mxu0 %v198
    %255 = vmatmul.bf16.gmra.mxu0 %v207
    %v256 = vpop.f32.mrf.mxu0
    %v257 = vadd.f32 %v162, %v256
    %v258 = vpop.f32.mrf.mxu0
    %v259 = vadd.f32 %v162, %v258
    %260 = vmatmul.bf16.gmra.mxu0 %v210
    %v261 = vpop.f32.mrf.mxu0
    %v262 = vadd.f32 %v162, %v261
    %v263 = vpop.f32.mrf.mxu0
    %v264 = vadd.f32 %v162, %v263
    %265 = vmatmul.bf16.gmra.mxu0 %v213
    %v266 = vpop.f32.mrf.mxu0
    %v267 = vadd.f32 %v162, %v266
    %v268 = vpop.f32.mrf.mxu0
    %v269 = vadd.f32 %v162, %v268
    %270 = vmatmul.bf16.gmra.mxu0 %v216
    %v271 = vpop.f32.mrf.mxu0
    %v272 = vadd.f32 %v162, %v271
    %v273 = vpop.f32.mrf.mxu0
    %v274 = vadd.f32 %v162, %v273
    %275 = vdwg.mxu0
    %v276 = vpack.c.bf16 %v257, %v228
    %v277 = vpack.c.bf16 %v259, %v230
    %v278 = vpack.c.bf16 %v262, %v233
    %v279 = vpack.c.bf16 %v264, %v235
    %v280 = vpack.c.bf16 %v267, %v238
    %v281 = vpack.c.bf16 %v269, %v240
    %v282 = vpack.c.bf16 %v272, %v243
    %v283 = vpack.c.bf16 %v274, %v245
    %284 = vst [vmem:[#allocation13] sm:$0xff] %v276
    %285 = vst [vmem:[#allocation13 + $0x8] sm:$0xff] %v277
    %286 = vst [vmem:[#allocation13 + $0x10] sm:$0xff] %v278
    %287 = vst [vmem:[#allocation13 + $0x18] sm:$0xff] %v279
    %288 = vst [vmem:[#allocation13 + $0x20] sm:$0xff] %v280
    %289 = vst [vmem:[#allocation13 + $0x28] sm:$0xff] %v281
    %290 = vst [vmem:[#allocation13 + $0x30] sm:$0xff] %v282
    %291 = vst [vmem:[#allocation13 + $0x38] sm:$0xff] %v283
    loop: start=0, step=1, limit=8
    $region119: #{bert_stack_segmentor_forward.1} parent=118 // loop_pre_header
      _
    $region120: #{bert_stack_segmentor_forward.1} parent=118 // loop_header
      %s293 = sphi 0, %s297
      %p294 = scmp.ge.s32.totalorder %s293, 8
      %v298 = vphi 0.0, %v379
      %v299 = vphi 0.0, %v373
      %v300 = vphi 0.0, %v467
      %v301 = vphi 0.0, %v461
    $region121: #{bert_stack_segmentor_forward.1} parent=118 // loop_header_branch
      %296 = sbr.rel (%p294) target = $region125
    $region122: #{bert_stack_segmentor_forward.1} parent=118 // loop_body
      %s302 = smul.u32 %s293, 8
      %s303 = sshra.s32 %s302, 3
      %s304 = sand.u32 %s302, 7
      %s305 = smul.u32 %s303, 2
      %s306 = smul.addr %s305, 4
      %s307 = scalar_lea.vmem [#allocation13], %s306
      %v308 = vld [vmem:[%s307] sm:$0xf]
      %v309 = vunpack.c.l.bf16 %v308
      %v310 = vpack.c.bf16 %v298, %v298
      %312 = vrot.lane.b32.xlu0 %v310, 32
      %v313 = vpop.permute.xlu0 %312
      %v318 = vunpack.c.l.b16 %v139
      %v319 = vunpack.c.l.b16 %v140
      %v320 = vunpack.c.l.b16 %v141
      %v321 = vunpack.c.l.b16 %v142
      %v322 = vpack.c.b16 %v319, %v318
      %v323 = vpack.c.b16 %v321, %v320
      %v327 = vsel %vm205, %v313, 0
      %329 = vmatpush.bf16.msra.mxu0 0
      %330 = vmatpush.bf16.msra.mxu0 0
      %331 = vmatpush.bf16.msra.mxu0 0
      %332 = vmatpush.bf16.msra.mxu0 0
      %333 = vmatpush.bf16.msra.mxu0 0
      %334 = vmatpush.bf16.msra.mxu0 0
      %335 = vmatpush.bf16.msra.mxu0 %v323
      %336 = vmatpush.bf16.msra.mxu0 %v322
      %337 = vmatmul.bf16.gmra.mxu0 %v327
      %v338 = vpop.f32.mrf.mxu0
      %v339 = vadd.f32 0.0, %v338
      %v340 = vpop.f32.mrf.mxu0
      %341 = vdwg.mxu0
      %v342 = vadd.f32 %v309, %v339
      %v343 = vxor.u32 %v342, 2147483648
      %v344 = vmul.f32 %v343, 1.442695
      %v345 = vpow.pop %v344
      %v346 = vadd.f32 %v345, 1.0
      %v347 = vrcp.pop %v346
      %v348 = vmul.f32 %v346, %v347
      %v349 = vsub.f32 1.0, %v348
      %v350 = vmul.f32 %v347, %v349
      %v351 = vadd.f32 %v347, %v350
      %vm352 = vweird.f32 %v346
      %vm353 = vweird.f32 %v347
      %vm354 = vmor %vm352, %vm353
      %v355 = vsel %vm354, %v347, %v351
      %v356 = vand.u32 2147483647, %v346
      %vm357 = vcmp.eq.f32.partialorder %v356, 8.507059e+37
      %v358 = vand.u32 %v346, 2147483648
      %v359 = vor.u32 1.1754944e-38, %v358
      %v360 = vsel %vm357, %v359, %v355
      %v361 = vmul.f32 1.0, %v360
      %v362 = vtanh.pop %v342
      %v363 = vmul.f32 %v361, %v299
      %365 = vrot.lane.b32.xlu0 %v362, 64
      %v366 = vpop.permute.xlu0 %365
      %v368 = vmul.f32 %v361, %v366
      %370 = vrot.lane.b32.xlu0 %v368, 32
      %v371 = vpop.permute.xlu0 %370
      %v373 = vadd.f32 %v363, %v371
      %v374 = vtanh.pop %v373
      %376 = vrot.lane.b32.xlu0 %v374, 64
      %v377 = vpop.permute.xlu0 %376
      %v379 = vmul.f32 %v361, %v377
      %v380 = vpack.c.bf16 %v379, %v379
      %382 = vrot.lane.b32.xlu0 %v380, 32
      %v383 = vpop.permute.xlu0 %382
      %s385 = smul.addr %s303, 4
      %s386 = scalar_lea.vmem [#allocation2], %s385
      %vm387 = vcmask 257024
      %388 = vst.msk [vmem:[%s386] sm:$0xf] %vm387, %v383
      %s389 = ssub.s32 7, %s293
      %s390 = smul.u32 %s389, 8
      %s391 = sshra.s32 %s390, 3
      %s392 = sand.u32 %s390, 7
      %s393 = smul.u32 %s391, 2
      %s394 = smul.addr %s393, 4
      %s395 = scalar_lea.vmem [#allocation13], %s394
      %v396 = vld [vmem:[%s395 + $0x4] sm:$0xf]
      %v397 = vunpack.c.l.bf16 %v396
      %v398 = vpack.c.bf16 %v300, %v300
      %400 = vrot.lane.b32.xlu0 %v398, 32
      %v401 = vpop.permute.xlu0 %400
      %v406 = vunpack.c.l.b16 %v143
      %v407 = vunpack.c.l.b16 %v144
      %v408 = vunpack.c.l.b16 %v145
      %v409 = vunpack.c.l.b16 %v146
      %v410 = vpack.c.b16 %v407, %v406
      %v411 = vpack.c.b16 %v409, %v408
      %v415 = vsel %vm205, %v401, 0
      %417 = vmatpush.bf16.msra.mxu0 0
      %418 = vmatpush.bf16.msra.mxu0 0
      %419 = vmatpush.bf16.msra.mxu0 0
      %420 = vmatpush.bf16.msra.mxu0 0
      %421 = vmatpush.bf16.msra.mxu0 0
      %422 = vmatpush.bf16.msra.mxu0 0
      %423 = vmatpush.bf16.msra.mxu0 %v411
      %424 = vmatpush.bf16.msra.mxu0 %v410
      %425 = vmatmul.bf16.gmra.mxu0 %v415
      %v426 = vpop.f32.mrf.mxu0
      %v427 = vadd.f32 0.0, %v426
      %v428 = vpop.f32.mrf.mxu0
      %429 = vdwg.mxu0
      %v430 = vadd.f32 %v397, %v427
      %v431 = vxor.u32 %v430, 2147483648
      %v432 = vmul.f32 %v431, 1.442695
      %v433 = vpow.pop %v432
      %v434 = vadd.f32 %v433, 1.0
      %v435 = vrcp.pop %v434
      %v436 = vmul.f32 %v434, %v435
      %v437 = vsub.f32 1.0, %v436
      %v438 = vmul.f32 %v435, %v437
      %v439 = vadd.f32 %v435, %v438
      %vm440 = vweird.f32 %v434
      %vm441 = vweird.f32 %v435
      %vm442 = vmor %vm440, %vm441
      %v443 = vsel %vm442, %v435, %v439
      %v444 = vand.u32 2147483647, %v434
      %vm445 = vcmp.eq.f32.partialorder %v444, 8.507059e+37
      %v446 = vand.u32 %v434, 2147483648
      %v447 = vor.u32 1.1754944e-38, %v446
      %v448 = vsel %vm445, %v447, %v443
      %v449 = vmul.f32 1.0, %v448
      %v450 = vtanh.pop %v430
      %v451 = vmul.f32 %v449, %v301
      %453 = vrot.lane.b32.xlu0 %v450, 64
      %v454 = vpop.permute.xlu0 %453
      %v456 = vmul.f32 %v449, %v454
      %458 = vrot.lane.b32.xlu0 %v456, 32
      %v459 = vpop.permute.xlu0 %458
      %v461 = vadd.f32 %v451, %v459
      %v462 = vtanh.pop %v461
      %464 = vrot.lane.b32.xlu0 %v462, 64
      %v465 = vpop.permute.xlu0 %464
      %v467 = vmul.f32 %v449, %v465
      %v468 = vpack.c.bf16 %v467, %v467
      %470 = vrot.lane.b32.xlu0 %v468, 32
      %v471 = vpop.permute.xlu0 %470
      %s473 = smul.addr %s391, 4
      %s474 = scalar_lea.vmem [#allocation3], %s473
      %475 = vst.msk [vmem:[%s474] sm:$0xf] %vm387, %v471
    $region123: #{bert_stack_segmentor_forward.1} parent=118 // loop_footer
      %s297 = sadd.s32 1, %s293
    $region124: #{bert_stack_segmentor_forward.1} parent=118 // loop_footer_branch
      %292 = sbr.rel target = $region120
    $region125: #{bert_stack_segmentor_forward.1} parent=118 // loop_exit
      _
  $region126: #{bert_stack_segmentor_forward.1} parent=0
    #allocation14 [shape = 'u8[16384]{0}', space=vmem, size = 0x4000, scoped, tag = 'scoped memory for bert_stack_segmentor_forward.1']
    #allocation15 [shape = 'u8[16384]{0}', space=vmem, size = 0x4000, scoped, tag = 'scoped memory for bert_stack_segmentor_forward.1']
    %s476 = smul.u32 4, 8
    %s477 = smul.u32 %s476, 1
    %s478 = sshll.u32 %s477, 4
    %479 = dma.done [#allocation8], %s478
    %v480 = vld [vmem:[#allocation4] sm:$0xf]
    %v481 = vld [vmem:[#allocation4 + $0x4] sm:$0xf]
    %v482 = vld [vmem:[#allocation4 + $0x8] sm:$0xf]
    %v483 = vld [vmem:[#allocation4 + $0xc] sm:$0xf]
    %v484 = vld [vmem:[#allocation4 + $0x10] sm:$0xf]
    %v485 = vld [vmem:[#allocation4 + $0x14] sm:$0xf]
    %v486 = vld [vmem:[#allocation4 + $0x18] sm:$0xf]
    %v487 = vld [vmem:[#allocation4 + $0x1c] sm:$0xf]
    %v488 = vld [vmem:[#allocation2] sm:$0xf]
    %v489 = vld [vmem:[#allocation2 + $0x4] sm:$0xf]
    %v490 = vld [vmem:[#allocation2 + $0x8] sm:$0xf]
    %v491 = vld [vmem:[#allocation2 + $0xc] sm:$0xf]
    %v492 = vld [vmem:[#allocation2 + $0x10] sm:$0xf]
    %v493 = vld [vmem:[#allocation2 + $0x14] sm:$0xf]
    %v494 = vld [vmem:[#allocation2 + $0x18] sm:$0xf]
    %v495 = vld [vmem:[#allocation2 + $0x1c] sm:$0xf]
    %v496 = vld [vmem:[#allocation3] sm:$0xf]
    %v497 = vld [vmem:[#allocation3 + $0x4] sm:$0xf]
    %v498 = vld [vmem:[#allocation3 + $0x8] sm:$0xf]
    %v499 = vld [vmem:[#allocation3 + $0xc] sm:$0xf]
    %v500 = vld [vmem:[#allocation3 + $0x10] sm:$0xf]
    %v501 = vld [vmem:[#allocation3 + $0x14] sm:$0xf]
    %v502 = vld [vmem:[#allocation3 + $0x18] sm:$0xf]
    %v503 = vld [vmem:[#allocation3 + $0x1c] sm:$0xf]
    %v512 = vunpack.c.l.b16 %v496
    %v513 = vunpack.c.l.b16 %v497
    %v514 = vunpack.c.l.b16 %v498
    %v515 = vunpack.c.l.b16 %v499
    %v516 = vunpack.c.l.b16 %v500
    %v517 = vunpack.c.l.b16 %v501
    %v518 = vunpack.c.l.b16 %v502
    %v519 = vunpack.c.l.b16 %v503
    %v520 = vpack.c.b16 %v513, %v512
    %v521 = vpack.c.b16 %v515, %v514
    %v522 = vpack.c.b16 %v517, %v516
    %v523 = vpack.c.b16 %v519, %v518
    %v528 = vunpack.c.l.b16 %v484
    %v529 = vunpack.c.l.b16 %v485
    %v530 = vunpack.c.l.b16 %v486
    %v531 = vunpack.c.l.b16 %v487
    %v532 = vpack.c.b16 %v529, %v528
    %v533 = vpack.c.b16 %v531, %v530
    %vm536 = vcmask 261120
    %v538 = vsel %vm536, %v520, 0
    %v541 = vsel %vm536, %v521, 0
    %v544 = vsel %vm536, %v522, 0
    %v547 = vsel %vm536, %v523, 0
    %549 = vmatpush.bf16.msra.mxu0 0
    %550 = vmatpush.bf16.msra.mxu0 0
    %551 = vmatpush.bf16.msra.mxu0 0
    %552 = vmatpush.bf16.msra.mxu0 0
    %553 = vmatpush.bf16.msra.mxu0 0
    %554 = vmatpush.bf16.msra.mxu0 0
    %555 = vmatpush.bf16.msra.mxu0 %v533
    %556 = vmatpush.bf16.msra.mxu0 %v532
    %557 = vmatmul.bf16.gmra.mxu0 %v538
    %v558 = vpop.f32.mrf.mxu0
    %v559 = vadd.f32 0.0, %v558
    %v560 = vpop.f32.mrf.mxu0
    %v561 = vadd.f32 0.0, %v560
    %562 = vmatmul.bf16.gmra.mxu0 %v541
    %v563 = vpop.f32.mrf.mxu0
    %v564 = vadd.f32 0.0, %v563
    %v565 = vpop.f32.mrf.mxu0
    %v566 = vadd.f32 0.0, %v565
    %567 = vmatmul.bf16.gmra.mxu0 %v544
    %v568 = vpop.f32.mrf.mxu0
    %v569 = vadd.f32 0.0, %v568
    %v570 = vpop.f32.mrf.mxu0
    %v571 = vadd.f32 0.0, %v570
    %572 = vmatmul.bf16.gmra.mxu0 %v547
    %v573 = vpop.f32.mrf.mxu0
    %v574 = vadd.f32 0.0, %v573
    %v575 = vpop.f32.mrf.mxu0
    %v576 = vadd.f32 0.0, %v575
    %577 = vdwg.mxu0
    %v586 = vunpack.c.l.b16 %v488
    %v587 = vunpack.c.l.b16 %v489
    %v588 = vunpack.c.l.b16 %v490
    %v589 = vunpack.c.l.b16 %v491
    %v590 = vunpack.c.l.b16 %v492
    %v591 = vunpack.c.l.b16 %v493
    %v592 = vunpack.c.l.b16 %v494
    %v593 = vunpack.c.l.b16 %v495
    %v594 = vpack.c.b16 %v587, %v586
    %v595 = vpack.c.b16 %v589, %v588
    %v596 = vpack.c.b16 %v591, %v590
    %v597 = vpack.c.b16 %v593, %v592
    %v602 = vunpack.c.l.b16 %v480
    %v603 = vunpack.c.l.b16 %v481
    %v604 = vunpack.c.l.b16 %v482
    %v605 = vunpack.c.l.b16 %v483
    %v606 = vpack.c.b16 %v603, %v602
    %v607 = vpack.c.b16 %v605, %v604
    %v611 = vsel %vm536, %v594, 0
    %v614 = vsel %vm536, %v595, 0
    %v617 = vsel %vm536, %v596, 0
    %v620 = vsel %vm536, %v597, 0
    %622 = vmatpush.bf16.msra.mxu0 0
    %623 = vmatpush.bf16.msra.mxu0 0
    %624 = vmatpush.bf16.msra.mxu0 0
    %625 = vmatpush.bf16.msra.mxu0 0
    %626 = vmatpush.bf16.msra.mxu0 0
    %627 = vmatpush.bf16.msra.mxu0 0
    %628 = vmatpush.bf16.msra.mxu0 %v607
    %629 = vmatpush.bf16.msra.mxu0 %v606
    %630 = vmatmul.bf16.gmra.mxu0 %v611
    %v631 = vpop.f32.mrf.mxu0
    %v632 = vadd.f32 %v559, %v631
    %v633 = vpop.f32.mrf.mxu0
    %v634 = vadd.f32 %v561, %v633
    %635 = vmatmul.bf16.gmra.mxu0 %v614
    %v636 = vpop.f32.mrf.mxu0
    %v637 = vadd.f32 %v564, %v636
    %v638 = vpop.f32.mrf.mxu0
    %v639 = vadd.f32 %v566, %v638
    %640 = vmatmul.bf16.gmra.mxu0 %v617
    %v641 = vpop.f32.mrf.mxu0
    %v642 = vadd.f32 %v569, %v641
    %v643 = vpop.f32.mrf.mxu0
    %v644 = vadd.f32 %v571, %v643
    %645 = vmatmul.bf16.gmra.mxu0 %v620
    %v646 = vpop.f32.mrf.mxu0
    %v647 = vadd.f32 %v574, %v646
    %v648 = vpop.f32.mrf.mxu0
    %v649 = vadd.f32 %v576, %v648
    %650 = vdwg.mxu0
    %v651 = vld [vmem:[%s7] sm:$0x1]
    %v653 = vperm.slane %v651, 0
    %v655 = vadd.f32 %v632, %v653
    %v656 = vadd.f32 %v634, %v653
    %v657 = vadd.f32 %v637, %v653
    %v658 = vadd.f32 %v639, %v653
    %v659 = vadd.f32 %v642, %v653
    %v660 = vadd.f32 %v644, %v653
    %v661 = vadd.f32 %v647, %v653
    %v662 = vadd.f32 %v649, %v653
    %v663 = vpack.c.bf16 %v655, %v655
    %v664 = vpack.c.bf16 %v656, %v656
    %v665 = vpack.c.bf16 %v657, %v657
    %v666 = vpack.c.bf16 %v658, %v658
    %v667 = vpack.c.bf16 %v659, %v659
    %v668 = vpack.c.bf16 %v660, %v660
    %v669 = vpack.c.bf16 %v661, %v661
    %v670 = vpack.c.bf16 %v662, %v662
    %671 = vst [vmem:[#allocation14] sm:$0xf] %v663
    %672 = vst [vmem:[#allocation14 + $0x4] sm:$0xf] %v664
    %673 = vst [vmem:[#allocation14 + $0x8] sm:$0xf] %v665
    %674 = vst [vmem:[#allocation14 + $0xc] sm:$0xf] %v666
    %675 = vst [vmem:[#allocation14 + $0x10] sm:$0xf] %v667
    %676 = vst [vmem:[#allocation14 + $0x14] sm:$0xf] %v668
    %677 = vst [vmem:[#allocation14 + $0x18] sm:$0xf] %v669
    %678 = vst [vmem:[#allocation14 + $0x1c] sm:$0xf] %v670
    %s679 = smul.u32 4, 4
    %s680 = smul.u32 %s679, 2
    %s681 = sshll.u32 %s680, 4
    %682 = dma.done %s64, %s681
    %s683 = smul.u32 %s679, 1
    %s684 = sshll.u32 %s683, 4
    %685 = dma.done %s89, %s684
    %v686 = vld [vmem:[%s6] sm:$0xf]
    %v687 = vld [vmem:[%s6 + $0x4] sm:$0xf]
    %v688 = vld [vmem:[%s6 + $0x8] sm:$0xf]
    %v689 = vld [vmem:[%s6 + $0xc] sm:$0xf]
    %v690 = vld [vmem:[#allocation5] sm:$0xff]
    %v691 = vld [vmem:[#allocation5 + $0x8] sm:$0xff]
    %v692 = vld [vmem:[#allocation5 + $0x10] sm:$0xff]
    %v693 = vld [vmem:[#allocation5 + $0x18] sm:$0xff]
    %v694 = vld [vmem:[#allocation6] sm:$0xf]
    %v695 = vld [vmem:[#allocation6 + $0x4] sm:$0xf]
    %v696 = vld [vmem:[#allocation6 + $0x8] sm:$0xf]
    %v697 = vld [vmem:[#allocation6 + $0xc] sm:$0xf]
    %v698 = vld [vmem:[%s8] sm:$0x1]
    %v700 = vperm.slane %v698, 0
    %vm702 = vcmask 257024
    %703 = vst.msk [vmem:[#allocation15] sm:$0xf] %vm702, 0
    loop: start=1, step=1, limit=8
    $region127: #{bert_stack_segmentor_forward.1} parent=126 // loop_pre_header
      _
    $region128: #{bert_stack_segmentor_forward.1} parent=126 // loop_header
      %s705 = sphi 1, %s709
      %p706 = scmp.ge.s32.totalorder %s705, 8
      %v710 = vphi 0.0, %v937
      %v711 = vphi 0.0, %v938
      %v712 = vphi 0.0, %v940
      %v713 = vphi 0.0, %v941
      %v714 = vphi 0.0, %v939
    $region129: #{bert_stack_segmentor_forward.1} parent=126 // loop_header_branch
      %708 = sbr.rel (%p706) target = $region133
    $region130: #{bert_stack_segmentor_forward.1} parent=126 // loop_body
      %s715 = ssub.s32 %s705, 1
      %s716 = smul.u32 %s715, 8
      %s717 = smul.u32 %s705, 8
      %s718 = sshra.s32 %s716, 3
      %s719 = sand.u32 %s716, 7
      %s720 = smul.addr %s718, 4
      %s721 = scalar_lea.vmem [#allocation14], %s720
      %v722 = vld [vmem:[%s721] sm:$0xf]
      %v723 = vunpack.c.l.bf16 %v722
      %v724 = vpack.c.bf16 %v710, %v710
      %726 = vrot.lane.b32.xlu0 %v724, 32
      %v727 = vpop.permute.xlu0 %726
      %v732 = vunpack.c.l.b16 %v686
      %v733 = vunpack.c.l.b16 %v687
      %v734 = vunpack.c.l.b16 %v688
      %v735 = vunpack.c.l.b16 %v689
      %v736 = vpack.c.b16 %v733, %v732
      %v737 = vpack.c.b16 %v735, %v734
      %v741 = vsel %vm536, %v727, 0
      %743 = vmatpush.bf16.msra.mxu0 0
      %744 = vmatpush.bf16.msra.mxu0 0
      %745 = vmatpush.bf16.msra.mxu0 0
      %746 = vmatpush.bf16.msra.mxu0 0
      %747 = vmatpush.bf16.msra.mxu0 0
      %748 = vmatpush.bf16.msra.mxu0 0
      %749 = vmatpush.bf16.msra.mxu0 %v737
      %750 = vmatpush.bf16.msra.mxu0 %v736
      %751 = vmatmul.bf16.gmra.mxu0 %v741
      %v752 = vpop.f32.mrf.mxu0
      %v753 = vadd.f32 0.0, %v752
      %v754 = vpop.f32.mrf.mxu0
      %755 = vdwg.mxu0
      %v756 = vadd.f32 %v723, %v753
      %v757 = vxor.u32 %v756, 2147483648
      %v758 = vmul.f32 %v757, 1.442695
      %v759 = vpow.pop %v758
      %v760 = vadd.f32 %v759, 1.0
      %v761 = vrcp.pop %v760
      %v762 = vmul.f32 %v760, %v761
      %v763 = vsub.f32 1.0, %v762
      %v764 = vmul.f32 %v761, %v763
      %v765 = vadd.f32 %v761, %v764
      %vm766 = vweird.f32 %v760
      %vm767 = vweird.f32 %v761
      %vm768 = vmor %vm766, %vm767
      %v769 = vsel %vm768, %v761, %v765
      %v770 = vand.u32 2147483647, %v760
      %vm771 = vcmp.eq.f32.partialorder %v770, 8.507059e+37
      %v772 = vand.u32 %v760, 2147483648
      %v773 = vor.u32 1.1754944e-38, %v772
      %v774 = vsel %vm771, %v773, %v769
      %v775 = vmul.f32 1.0, %v774
      %v776 = vtanh.pop %v756
      %v777 = vmul.f32 %v775, %v711
      %779 = vrot.lane.b32.xlu0 %v776, 64
      %v780 = vpop.permute.xlu0 %779
      %v782 = vmul.f32 %v775, %v780
      %784 = vrot.lane.b32.xlu0 %v782, 32
      %v785 = vpop.permute.xlu0 %784
      %v787 = vadd.f32 %v777, %v785
      %v788 = vtanh.pop %v787
      %790 = vrot.lane.b32.xlu0 %v788, 64
      %v791 = vpop.permute.xlu0 %790
      %v793 = vmul.f32 %v775, %v791
      %v794 = vpack.c.bf16 %v793, %v793
      %796 = vrot.lane.b32.xlu0 %v794, 32
      %v797 = vpop.permute.xlu0 %796
      %v802 = vunpack.c.l.b16 %v690
      %v803 = vunpack.c.h.b16 %v690
      %v804 = vunpack.c.l.b16 %v691
      %v805 = vunpack.c.h.b16 %v691
      %v806 = vunpack.c.l.b16 %v692
      %v807 = vunpack.c.h.b16 %v692
      %v808 = vunpack.c.l.b16 %v693
      %v809 = vunpack.c.h.b16 %v693
      %v810 = vpack.c.b16 %v804, %v802
      %v811 = vpack.c.b16 %v805, %v803
      %v812 = vpack.c.b16 %v808, %v806
      %v813 = vpack.c.b16 %v809, %v807
      %v819 = vsel %vm536, %v797, 0
      %821 = vmatpush.bf16.msra.mxu0 0
      %822 = vmatpush.bf16.msra.mxu0 0
      %823 = vmatpush.bf16.msra.mxu0 0
      %824 = vmatpush.bf16.msra.mxu0 0
      %825 = vmatpush.bf16.msra.mxu0 0
      %826 = vmatpush.bf16.msra.mxu0 0
      %827 = vmatpush.bf16.msra.mxu0 %v812
      %828 = vmatpush.bf16.msra.mxu0 %v810
      %829 = vmatmul.bf16.gmra.mxu0 %v819
      %v830 = vpop.f32.mrf.mxu0
      %v831 = vadd.f32 0.0, %v830
      %v832 = vpop.f32.mrf.mxu0
      %833 = vdwg.mxu0
      %834 = vmatpush.bf16.msra.mxu0 0
      %835 = vmatpush.bf16.msra.mxu0 0
      %836 = vmatpush.bf16.msra.mxu0 0
      %837 = vmatpush.bf16.msra.mxu0 0
      %838 = vmatpush.bf16.msra.mxu0 0
      %839 = vmatpush.bf16.msra.mxu0 0
      %840 = vmatpush.bf16.msra.mxu0 %v813
      %841 = vmatpush.bf16.msra.mxu0 %v811
      %842 = vmatmul.bf16.gmra.mxu0 %v819
      %v843 = vpop.f32.mrf.mxu0
      %v844 = vadd.f32 0.0, %v843
      %v845 = vpop.f32.mrf.mxu0
      %846 = vdwg.mxu0
      %v847 = vadd.f32 %v831, %v714
      %v848 = vadd.f32 %v847, %v700
      %v849 = vpack.c.bf16 %v712, %v712
      %851 = vrot.lane.b32.xlu0 %v849, 32
      %v852 = vpop.permute.xlu0 %851
      %v857 = vunpack.c.l.b16 %v694
      %v858 = vunpack.c.l.b16 %v695
      %v859 = vunpack.c.l.b16 %v696
      %v860 = vunpack.c.l.b16 %v697
      %v861 = vpack.c.b16 %v858, %v857
      %v862 = vpack.c.b16 %v860, %v859
      %v866 = vsel %vm536, %v852, 0
      %868 = vmatpush.bf16.msra.mxu0 0
      %869 = vmatpush.bf16.msra.mxu0 0
      %870 = vmatpush.bf16.msra.mxu0 0
      %871 = vmatpush.bf16.msra.mxu0 0
      %872 = vmatpush.bf16.msra.mxu0 0
      %873 = vmatpush.bf16.msra.mxu0 0
      %874 = vmatpush.bf16.msra.mxu0 %v862
      %875 = vmatpush.bf16.msra.mxu0 %v861
      %876 = vmatmul.bf16.gmra.mxu0 %v866
      %v877 = vpop.f32.mrf.mxu0
      %v878 = vadd.f32 0.0, %v877
      %v879 = vpop.f32.mrf.mxu0
      %880 = vdwg.mxu0
      %v881 = vadd.f32 %v848, %v878
      %v882 = vxor.u32 %v881, 2147483648
      %v883 = vmul.f32 %v882, 1.442695
      %v884 = vpow.pop %v883
      %v885 = vadd.f32 %v884, 1.0
      %v886 = vrcp.pop %v885
      %v887 = vmul.f32 %v885, %v886
      %v888 = vsub.f32 1.0, %v887
      %v889 = vmul.f32 %v886, %v888
      %v890 = vadd.f32 %v886, %v889
      %vm891 = vweird.f32 %v885
      %vm892 = vweird.f32 %v886
      %vm893 = vmor %vm891, %vm892
      %v894 = vsel %vm893, %v886, %v890
      %v895 = vand.u32 2147483647, %v885
      %vm896 = vcmp.eq.f32.partialorder %v895, 8.507059e+37
      %v897 = vand.u32 %v885, 2147483648
      %v898 = vor.u32 1.1754944e-38, %v897
      %v899 = vsel %vm896, %v898, %v894
      %v900 = vmul.f32 1.0, %v899
      %v901 = vtanh.pop %v881
      %v902 = vmul.f32 %v900, %v713
      %904 = vrot.lane.b32.xlu0 %v901, 64
      %v905 = vpop.permute.xlu0 %904
      %v907 = vmul.f32 %v900, %v905
      %909 = vrot.lane.b32.xlu0 %v907, 32
      %v910 = vpop.permute.xlu0 %909
      %v912 = vadd.f32 %v902, %v910
      %v913 = vtanh.pop %v912
      %915 = vrot.lane.b32.xlu0 %v913, 64
      %v916 = vpop.permute.xlu0 %915
      %v918 = vmul.f32 %v900, %v916
      %v919 = vpack.c.bf16 %v918, %v918
      %921 = vrot.lane.b32.xlu0 %v919, 32
      %v922 = vpop.permute.xlu0 %921
      %s924 = sshra.s32 %s717, 3
      %s925 = sand.u32 %s717, 7
      %s926 = smul.addr %s924, 4
      %s927 = scalar_lea.vmem [#allocation15], %s926
      %928 = vst.msk [vmem:[%s927] sm:$0xf] %vm702, %v922
      %s929 = scalar_lea.vmem %s1, %s717
      %v930 = vld [vmem:[%s929] sm:$0xff]
      %vm931 = vcmp.eq.s32.totalorder %v930, 0
      %v932 = vsel %vm931, 1, 0
      %933 = vset.pattern.permute.xlu0 0
      %934 = vperm.xlu0 %933, %v932
      %v935 = vpop.permute.xlu0 %934
      %vm936 = vcmp.eq.s32.totalorder %v935, 1
      %v937 = vsel %vm936, %v793, 0.0
      %v938 = vsel %vm936, %v787, 0.0
      %v939 = vsel %vm936, %v844, 0.0
      %v940 = vsel %vm936, %v712, %v918
      %v941 = vsel %vm936, %v713, %v912
    $region131: #{bert_stack_segmentor_forward.1} parent=126 // loop_footer
      %s709 = sadd.s32 1, %s705
    $region132: #{bert_stack_segmentor_forward.1} parent=126 // loop_footer_branch
      %704 = sbr.rel target = $region128
    $region133: #{bert_stack_segmentor_forward.1} parent=126 // loop_exit
      _
    %s942 = smul.u32 4, 12
    %s943 = smul.u32 %s942, 1
    %s944 = sshll.u32 %s943, 4
    %945 = dma.done %s110, %s944
    %v946 = vld [vmem:[#allocation7] sm:$0xf]
    %v947 = vld [vmem:[#allocation7 + $0x4] sm:$0xf]
    %v948 = vld [vmem:[#allocation7 + $0x8] sm:$0xf]
    %v949 = vld [vmem:[#allocation7 + $0xc] sm:$0xf]
    %v950 = vld [vmem:[#allocation7 + $0x10] sm:$0xf]
    %v951 = vld [vmem:[#allocation7 + $0x14] sm:$0xf]
    %v952 = vld [vmem:[#allocation7 + $0x18] sm:$0xf]
    %v953 = vld [vmem:[#allocation7 + $0x1c] sm:$0xf]
    %v954 = vld [vmem:[#allocation7 + $0x20] sm:$0xf]
    %v955 = vld [vmem:[#allocation7 + $0x24] sm:$0xf]
    %v956 = vld [vmem:[#allocation7 + $0x28] sm:$0xf]
    %v957 = vld [vmem:[#allocation7 + $0x2c] sm:$0xf]
    %v958 = vld [vmem:[#allocation15] sm:$0xf]
    %v959 = vld [vmem:[#allocation15 + $0x4] sm:$0xf]
    %v960 = vld [vmem:[#allocation15 + $0x8] sm:$0xf]
    %v961 = vld [vmem:[#allocation15 + $0xc] sm:$0xf]
    %v962 = vld [vmem:[#allocation15 + $0x10] sm:$0xf]
    %v963 = vld [vmem:[#allocation15 + $0x14] sm:$0xf]
    %v964 = vld [vmem:[#allocation15 + $0x18] sm:$0xf]
    %v965 = vld [vmem:[#allocation15 + $0x1c] sm:$0xf]
    %v966 = vld [vmem:[#allocation2] sm:$0xf]
    %v967 = vld [vmem:[#allocation2 + $0x4] sm:$0xf]
    %v968 = vld [vmem:[#allocation2 + $0x8] sm:$0xf]
    %v969 = vld [vmem:[#allocation2 + $0xc] sm:$0xf]
    %v970 = vld [vmem:[#allocation2 + $0x10] sm:$0xf]
    %v971 = vld [vmem:[#allocation2 + $0x14] sm:$0xf]
    %v972 = vld [vmem:[#allocation2 + $0x18] sm:$0xf]
    %v973 = vld [vmem:[#allocation2 + $0x1c] sm:$0xf]
    %v982 = vunpack.c.l.b16 %v966
    %v983 = vunpack.c.l.b16 %v967
    %v984 = vunpack.c.l.b16 %v968
    %v985 = vunpack.c.l.b16 %v969
    %v986 = vunpack.c.l.b16 %v970
    %v987 = vunpack.c.l.b16 %v971
    %v988 = vunpack.c.l.b16 %v972
    %v989 = vunpack.c.l.b16 %v973
    %v990 = vpack.c.b16 %v983, %v982
    %v991 = vpack.c.b16 %v985, %v984
    %v992 = vpack.c.b16 %v987, %v986
    %v993 = vpack.c.b16 %v989, %v988
    %v998 = vunpack.c.l.b16 %v950
    %v999 = vunpack.c.l.b16 %v951
    %v1000 = vunpack.c.l.b16 %v952
    %v1001 = vunpack.c.l.b16 %v953
    %v1002 = vpack.c.b16 %v999, %v998
    %v1003 = vpack.c.b16 %v1001, %v1000
    %v1007 = vsel %vm536, %v990, 0
    %v1010 = vsel %vm536, %v991, 0
    %v1013 = vsel %vm536, %v992, 0
    %v1016 = vsel %vm536, %v993, 0
    %1018 = vmatpush.bf16.msra.mxu0 0
    %1019 = vmatpush.bf16.msra.mxu0 0
    %1020 = vmatpush.bf16.msra.mxu0 0
    %1021 = vmatpush.bf16.msra.mxu0 0
    %1022 = vmatpush.bf16.msra.mxu0 0
    %1023 = vmatpush.bf16.msra.mxu0 0
    %1024 = vmatpush.bf16.msra.mxu0 %v1003
    %1025 = vmatpush.bf16.msra.mxu0 %v1002
    %1026 = vmatmul.bf16.gmra.mxu0 %v1007
    %v1027 = vpop.f32.mrf.mxu0
    %v1028 = vadd.f32 0.0, %v1027
    %v1029 = vpop.f32.mrf.mxu0
    %v1030 = vadd.f32 0.0, %v1029
    %1031 = vmatmul.bf16.gmra.mxu0 %v1010
    %v1032 = vpop.f32.mrf.mxu0
    %v1033 = vadd.f32 0.0, %v1032
    %v1034 = vpop.f32.mrf.mxu0
    %v1035 = vadd.f32 0.0, %v1034
    %1036 = vmatmul.bf16.gmra.mxu0 %v1013
    %v1037 = vpop.f32.mrf.mxu0
    %v1038 = vadd.f32 0.0, %v1037
    %v1039 = vpop.f32.mrf.mxu0
    %v1040 = vadd.f32 0.0, %v1039
    %1041 = vmatmul.bf16.gmra.mxu0 %v1016
    %v1042 = vpop.f32.mrf.mxu0
    %v1043 = vadd.f32 0.0, %v1042
    %v1044 = vpop.f32.mrf.mxu0
    %v1045 = vadd.f32 0.0, %v1044
    %1046 = vdwg.mxu0
    %v1055 = vunpack.c.l.b16 %v958
    %v1056 = vunpack.c.l.b16 %v959
    %v1057 = vunpack.c.l.b16 %v960
    %v1058 = vunpack.c.l.b16 %v961
    %v1059 = vunpack.c.l.b16 %v962
    %v1060 = vunpack.c.l.b16 %v963
    %v1061 = vunpack.c.l.b16 %v964
    %v1062 = vunpack.c.l.b16 %v965
    %v1063 = vpack.c.b16 %v1056, %v1055
    %v1064 = vpack.c.b16 %v1058, %v1057
    %v1065 = vpack.c.b16 %v1060, %v1059
    %v1066 = vpack.c.b16 %v1062, %v1061
    %v1071 = vunpack.c.l.b16 %v946
    %v1072 = vunpack.c.l.b16 %v947
    %v1073 = vunpack.c.l.b16 %v948
    %v1074 = vunpack.c.l.b16 %v949
    %v1075 = vpack.c.b16 %v1072, %v1071
    %v1076 = vpack.c.b16 %v1074, %v1073
    %v1080 = vsel %vm536, %v1063, 0
    %v1083 = vsel %vm536, %v1064, 0
    %v1086 = vsel %vm536, %v1065, 0
    %v1089 = vsel %vm536, %v1066, 0
    %1091 = vmatpush.bf16.msra.mxu0 0
    %1092 = vmatpush.bf16.msra.mxu0 0
    %1093 = vmatpush.bf16.msra.mxu0 0
    %1094 = vmatpush.bf16.msra.mxu0 0
    %1095 = vmatpush.bf16.msra.mxu0 0
    %1096 = vmatpush.bf16.msra.mxu0 0
    %1097 = vmatpush.bf16.msra.mxu0 %v1076
    %1098 = vmatpush.bf16.msra.mxu0 %v1075
    %1099 = vmatmul.bf16.gmra.mxu0 %v1080
    %v1100 = vpop.f32.mrf.mxu0
    %v1101 = vadd.f32 %v1028, %v1100
    %v1102 = vpop.f32.mrf.mxu0
    %v1103 = vadd.f32 %v1030, %v1102
    %1104 = vmatmul.bf16.gmra.mxu0 %v1083
    %v1105 = vpop.f32.mrf.mxu0
    %v1106 = vadd.f32 %v1033, %v1105
    %v1107 = vpop.f32.mrf.mxu0
    %v1108 = vadd.f32 %v1035, %v1107
    %1109 = vmatmul.bf16.gmra.mxu0 %v1086
    %v1110 = vpop.f32.mrf.mxu0
    %v1111 = vadd.f32 %v1038, %v1110
    %v1112 = vpop.f32.mrf.mxu0
    %v1113 = vadd.f32 %v1040, %v1112
    %1114 = vmatmul.bf16.gmra.mxu0 %v1089
    %v1115 = vpop.f32.mrf.mxu0
    %v1116 = vadd.f32 %v1043, %v1115
    %v1117 = vpop.f32.mrf.mxu0
    %v1118 = vadd.f32 %v1045, %v1117
    %1119 = vdwg.mxu0
    %v1120 = vld [vmem:[#allocation3] sm:$0xf]
    %v1121 = vld [vmem:[#allocation3 + $0x4] sm:$0xf]
    %v1122 = vld [vmem:[#allocation3 + $0x8] sm:$0xf]
    %v1123 = vld [vmem:[#allocation3 + $0xc] sm:$0xf]
    %v1124 = vld [vmem:[#allocation3 + $0x10] sm:$0xf]
    %v1125 = vld [vmem:[#allocation3 + $0x14] sm:$0xf]
    %v1126 = vld [vmem:[#allocation3 + $0x18] sm:$0xf]
    %v1127 = vld [vmem:[#allocation3 + $0x1c] sm:$0xf]
    %v1136 = vunpack.c.l.b16 %v1120
    %v1137 = vunpack.c.l.b16 %v1121
    %v1138 = vunpack.c.l.b16 %v1122
    %v1139 = vunpack.c.l.b16 %v1123
    %v1140 = vunpack.c.l.b16 %v1124
    %v1141 = vunpack.c.l.b16 %v1125
    %v1142 = vunpack.c.l.b16 %v1126
    %v1143 = vunpack.c.l.b16 %v1127
    %v1144 = vpack.c.b16 %v1137, %v1136
    %v1145 = vpack.c.b16 %v1139, %v1138
    %v1146 = vpack.c.b16 %v1141, %v1140
    %v1147 = vpack.c.b16 %v1143, %v1142
    %v1152 = vunpack.c.l.b16 %v954
    %v1153 = vunpack.c.l.b16 %v955
    %v1154 = vunpack.c.l.b16 %v956
    %v1155 = vunpack.c.l.b16 %v957
    %v1156 = vpack.c.b16 %v1153, %v1152
    %v1157 = vpack.c.b16 %v1155, %v1154
    %v1161 = vsel %vm536, %v1144, 0
    %v1164 = vsel %vm536, %v1145, 0
    %v1167 = vsel %vm536, %v1146, 0
    %v1170 = vsel %vm536, %v1147, 0
    %1172 = vmatpush.bf16.msra.mxu0 0
    %1173 = vmatpush.bf16.msra.mxu0 0
    %1174 = vmatpush.bf16.msra.mxu0 0
    %1175 = vmatpush.bf16.msra.mxu0 0
    %1176 = vmatpush.bf16.msra.mxu0 0
    %1177 = vmatpush.bf16.msra.mxu0 0
    %1178 = vmatpush.bf16.msra.mxu0 %v1157
    %1179 = vmatpush.bf16.msra.mxu0 %v1156
    %1180 = vmatmul.bf16.gmra.mxu0 %v1161
    %v1181 = vpop.f32.mrf.mxu0
    %v1182 = vadd.f32 0.0, %v1181
    %v1183 = vpop.f32.mrf.mxu0
    %v1184 = vadd.f32 0.0, %v1183
    %1185 = vmatmul.bf16.gmra.mxu0 %v1164
    %v1186 = vpop.f32.mrf.mxu0
    %v1187 = vadd.f32 0.0, %v1186
    %v1188 = vpop.f32.mrf.mxu0
    %v1189 = vadd.f32 0.0, %v1188
    %1190 = vmatmul.bf16.gmra.mxu0 %v1167
    %v1191 = vpop.f32.mrf.mxu0
    %v1192 = vadd.f32 0.0, %v1191
    %v1193 = vpop.f32.mrf.mxu0
    %v1194 = vadd.f32 0.0, %v1193
    %1195 = vmatmul.bf16.gmra.mxu0 %v1170
    %v1196 = vpop.f32.mrf.mxu0
    %v1197 = vadd.f32 0.0, %v1196
    %v1198 = vpop.f32.mrf.mxu0
    %v1199 = vadd.f32 0.0, %v1198
    %1200 = vdwg.mxu0
    %v1201 = vadd.f32 %v1101, %v1182
    %v1202 = vadd.f32 %v1103, %v1184
    %v1203 = vadd.f32 %v1106, %v1187
    %v1204 = vadd.f32 %v1108, %v1189
    %v1205 = vadd.f32 %v1111, %v1192
    %v1206 = vadd.f32 %v1113, %v1194
    %v1207 = vadd.f32 %v1116, %v1197
    %v1208 = vadd.f32 %v1118, %v1199
    %v1209 = vld [vmem:[%s9] sm:$0x1]
    %v1211 = vperm.slane %v1209, 0
    %v1213 = vadd.f32 %v1201, %v1211
    %v1214 = vadd.f32 %v1202, %v1211
    %v1215 = vadd.f32 %v1203, %v1211
    %v1216 = vadd.f32 %v1204, %v1211
    %v1217 = vadd.f32 %v1205, %v1211
    %v1218 = vadd.f32 %v1206, %v1211
    %v1219 = vadd.f32 %v1207, %v1211
    %v1220 = vadd.f32 %v1208, %v1211
    %1221 = vst [vmem:[%s14] sm:$0xff] %v1213
    %1222 = vst [vmem:[%s14 + $0x8] sm:$0xff] %v1214
    %1223 = vst [vmem:[%s14 + $0x10] sm:$0xff] %v1215
    %1224 = vst [vmem:[%s14 + $0x18] sm:$0xff] %v1216
    %1225 = vst [vmem:[%s14 + $0x20] sm:$0xff] %v1217
    %1226 = vst [vmem:[%s14 + $0x28] sm:$0xff] %v1218
    %1227 = vst [vmem:[%s14 + $0x30] sm:$0xff] %v1219
    %1228 = vst [vmem:[%s14 + $0x38] sm:$0xff] %v1220
  // Predicated region
  $region134: #{bert_stack_segmentor_forward.1} parent=0 // pred_check
    _
  $region135: #{bert_stack_segmentor_forward.1} parent=0 // pred_check_branch
    %1230 = sbr.rel (0) target = $region137
  $region136: #{bert_stack_segmentor_forward.1} parent=0 // pred_region
    _
  $region137: #{bert_stack_segmentor_forward.1} parent=0 // pred_fallthru
    _
  // Predicated region
  $region138: #{bert_stack_segmentor_forward.1} parent=0 // pred_check
    _
  $region139: #{bert_stack_segmentor_forward.1} parent=0 // pred_check_branch
    %1232 = sbr.rel (0) target = $region141
  $region140: #{bert_stack_segmentor_forward.1} parent=0 // pred_region
    _
  $region141: #{bert_stack_segmentor_forward.1} parent=0 // pred_fallthru
    _
  %1233 = vsyncmov [#allocation8]
  %s1234 = vpop.sfrf %1233
  %p1235 = scmp.eq.s32.totalorder %s1234, 0
  %p1236 = pneg %p1235
  %1238 = shalt.err (%p1236)
  %s1239 = scalar_lea.sflag [#allocation8], 1
  %1240 = vsyncmov %s1239
  %s1241 = vpop.sfrf %1240
  %p1242 = scmp.eq.s32.totalorder %s1241, 0
  %p1243 = pneg %p1242
  %1245 = shalt.err (%p1243)
  %s1246 = scalar_lea.sflag [#allocation8], 2
  %1247 = vsyncmov %s1246
  %s1248 = vpop.sfrf %1247
  %p1249 = scmp.eq.s32.totalorder %s1248, 0
  %p1250 = pneg %p1249
  %1252 = shalt.err (%p1250)
  %s1253 = scalar_lea.sflag [#allocation8], 3
  %1254 = vsyncmov %s1253
  %s1255 = vpop.sfrf %1254
  %p1256 = scmp.eq.s32.totalorder %s1255, 0
  %p1257 = pneg %p1256
  %1259 = shalt.err (%p1257)

</llo_original>
